<compile_context>
chip_gen: v7x
topology: tpu7x:2x2x1
jax: 0.10.0
libtpu: 0.0.40
codegen_flags: <defaults>
</compile_context>

<pallas_src>
import functools
import math

import jax
import jax.numpy as jnp
from jax.experimental import pallas as pl
from jax.experimental.pallas import tpu as pltpu

_MASK_FILL = -1e9


def encoder_block_kernel(
    xq_ref, xkv_ref, mask_ref,
    wq_ref, bq_ref, wk_ref, bk_ref, wv_ref, bv_ref, wo_ref, bo_ref,
    g1_ref, be1_ref,
    w1_ref, b1_ref, w2_ref, b2_ref,
    g2_ref, be2_ref,
    out_ref,
    *, n_heads: int, d_k: int, d_v: int,
):
    f32 = jnp.float32
    bf16 = jnp.bfloat16

    x_q = xq_ref[0].astype(f32)      # (TQ, D)  residual path kept in f32
    x_kv = xkv_ref[0]                # (S,  D)
    mask = mask_ref[0]               # (TQ, S)

    tq = x_q.shape[0]
    s_len = x_kv.shape[0]

    xq16 = x_q.astype(bf16)
    xkv16 = x_kv.astype(bf16)

    # ---- fused QKV projections (bf16 in, f32 accumulate) -----------------
    q = jnp.dot(xq16, wq_ref[...], preferred_element_type=f32) + bq_ref[...]    # (TQ, H*dk)
    k = jnp.dot(xkv16, wk_ref[...], preferred_element_type=f32) + bk_ref[...]   # (S,  H*dk)
    v = jnp.dot(xkv16, wv_ref[...], preferred_element_type=f32) + bv_ref[...]   # (S,  H*dv)

    # heads-as-batch layout: (H, rows, head_dim)
    q3 = jnp.transpose(q.reshape(tq, n_heads, d_k), (1, 0, 2)).astype(bf16)     # (H, TQ, dk)
    k3 = jnp.transpose(k.reshape(s_len, n_heads, d_k), (1, 0, 2)).astype(bf16)  # (H, S,  dk)
    v3 = jnp.transpose(v.reshape(s_len, n_heads, d_v), (1, 0, 2)).astype(bf16)  # (H, S,  dv)

    # ---- batched attention ------------------------------------------------
    scale = 1.0 / math.sqrt(d_k)
    scores = jnp.einsum("hqd,hkd->hqk", q3, k3,
                        preferred_element_type=f32) * scale                      # (H, TQ, S)
    # exact masked_fill(-1e9) semantics, one broadcast select over all heads
    scores = jnp.where(mask[None, :, :] > 0.0, scores, _MASK_FILL)

    m = jnp.max(scores, axis=-1, keepdims=True)
    e = jnp.exp(scores - m)
    p = e * pl.reciprocal(jnp.sum(e, axis=-1, keepdims=True), approx=True)

    ctx3 = jnp.einsum("hqk,hkv->hqv", p.astype(bf16), v3,
                      preferred_element_type=f32)                                # (H, TQ, dv)
    ctx = jnp.transpose(ctx3, (1, 0, 2)).reshape(tq, n_heads * d_v)              # (TQ, H*dv)

    attn = jnp.dot(ctx.astype(bf16), wo_ref[...],
                   preferred_element_type=f32) + bo_ref[...]                     # (TQ, D)

    # ---- Residual + LayerNorm 1 (f32) -------------------------------------
    def layer_norm(t, g, b, eps=1e-5):
        mu = jnp.mean(t, axis=-1, keepdims=True)
        var = jnp.mean((t - mu) ** 2, axis=-1, keepdims=True)
        return (t - mu) * jax.lax.rsqrt(var + eps) * g + b

    y1 = layer_norm(x_q + attn, g1_ref[...], be1_ref[...])                       # (TQ, D)

    # ---- FeedForward: Linear -> ReLU -> Linear -----------------------------
    h1 = jnp.dot(y1.astype(bf16), w1_ref[...], preferred_element_type=f32) + b1_ref[...]
    h1 = jnp.maximum(h1, 0.0)
    ffn = jnp.dot(h1.astype(bf16), w2_ref[...], preferred_element_type=f32) + b2_ref[...]

    # ---- Residual + LayerNorm 2 -------------------------------------------
    y2 = layer_norm(y1 + ffn, g2_ref[...], be2_ref[...])

    out_ref[0] = y2.astype(out_ref.dtype)


def _pick_q_tile(s):
    for t in (128, 64, 32, 16, 8):
        if s % t == 0:
            return t
    return s   # s not a multiple of 8 -> single full-S block (full-dim exemption)


def encoder_block(x, pad_mask, params, *, n_heads, d_k, d_v, q_tile=None):
    """x: (B, S, D) float32; pad_mask: (B, S, S) (1 = keep, 0 = masked)."""
    B, S, D = x.shape
    d_ff = params["w1"].shape[1]

    tq = q_tile if q_tile is not None else _pick_q_tile(S)
    assert S % tq == 0, "q_tile must divide sequence length"
    n_q = S // tq

    pad_mask = pad_mask.astype(jnp.float32)

    # matmul weights live in HBM as bf16 (halves DMA + VMEM); biases / LN stay f32
    bf16 = jnp.bfloat16
    wq = params["wq"].astype(bf16); wk = params["wk"].astype(bf16)
    wv = params["wv"].astype(bf16); wo = params["wo"].astype(bf16)
    w1 = params["w1"].astype(bf16); w2 = params["w2"].astype(bf16)

    kernel = functools.partial(
        encoder_block_kernel, n_heads=n_heads, d_k=d_k, d_v=d_v)

    def full(shape):
        # grid-invariant weight / bias block (block index never changes -> no re-DMA)
        return pl.BlockSpec(shape, lambda b, qi: (0, 0))

    hdk = n_heads * d_k
    hdv = n_heads * d_v

    grid_spec = pltpu.PrefetchScalarGridSpec(
        num_scalar_prefetch=0,
        grid=(B, n_q),
        in_specs=[
            pl.BlockSpec((1, tq, D), lambda b, qi: (b, qi, 0)),   # x  (query tile)
            pl.BlockSpec((1, S, D), lambda b, qi: (b, 0, 0)),     # x  (full S for K/V)
            pl.BlockSpec((1, tq, S), lambda b, qi: (b, qi, 0)),   # pad_mask tile
            full((D, hdk)), full((1, hdk)),                       # Wq, bq
            full((D, hdk)), full((1, hdk)),                       # Wk, bk
            full((D, hdv)), full((1, hdv)),                       # Wv, bv
            full((hdv, D)), full((1, D)),                         # Wo, bo
            full((1, D)), full((1, D)),                           # LN1 gamma, beta
            full((D, d_ff)), full((1, d_ff)),                     # FFN W1, b1
            full((d_ff, D)), full((1, D)),                        # FFN W2, b2
            full((1, D)), full((1, D)),                           # LN2 gamma, beta
        ],
        out_specs=pl.BlockSpec((1, tq, D), lambda b, qi: (b, qi, 0)),
    )

    # advisory cost estimate (matmuls dominate; exp on the score tensor)
    flops = int(2 * B * S * (D * (2 * hdk + hdv)      # Q, K, V projections
                             + S * (hdk + hdv)        # scores + context
                             + hdv * D                # output projection
                             + 2 * D * d_ff))         # FFN
    transcendentals = int(B * n_heads * S * S)
    weight_bytes = sum(int(w.size) * 2 for w in (wq, wk, wv, wo, w1, w2))
    bytes_accessed = int(2 * x.size * 4 + pad_mask.size * 4 + weight_bytes)

    return pl.pallas_call(
        kernel,
        out_shape=jax.ShapeDtypeStruct((B, S, D), x.dtype),
        grid_spec=grid_spec,
        compiler_params=pltpu.CompilerParams(
            dimension_semantics=("parallel", "parallel"),
            # explicit scoped-VMEM budget; re-derive / shrink tq for v7x (64 MiB
            # physical) at large D / d_ff.
            vmem_limit_bytes=64 * 1024 * 1024,
        ),
        cost_estimate=pl.CostEstimate(
            flops=flops, transcendentals=transcendentals,
            bytes_accessed=bytes_accessed),
    )(
        x, x, pad_mask,
        wq, params["bq"], wk, params["bk"],
        wv, params["bv"], wo, params["bo"],
        params["ln1_g"], params["ln1_b"],
        w1, params["b1"], w2, params["b2"],
        params["ln2_g"], params["ln2_b"],
    )


def init_params(key, d_model, d_k, d_v, n_heads, d_ff):
    ks = jax.random.split(key, 8)

    def lin(k, fan_in, fan_out):
        scale = 1.0 / math.sqrt(fan_in)
        return jax.random.uniform(k, (fan_in, fan_out), jnp.float32, -scale, scale)

    return {
        "wq": lin(ks[0], d_model, n_heads * d_k),
        "bq": jnp.zeros((1, n_heads * d_k), jnp.float32),
        "wk": lin(ks[1], d_model, n_heads * d_k),
        "bk": jnp.zeros((1, n_heads * d_k), jnp.float32),
        "wv": lin(ks[2], d_model, n_heads * d_v),
        "bv": jnp.zeros((1, n_heads * d_v), jnp.float32),
        "wo": lin(ks[3], n_heads * d_v, d_model),
        "bo": jnp.zeros((1, d_model), jnp.float32),
        "ln1_g": jnp.ones((1, d_model), jnp.float32),
        "ln1_b": jnp.zeros((1, d_model), jnp.float32),
        "w1": lin(ks[4], d_model, d_ff),
        "b1": jnp.zeros((1, d_ff), jnp.float32),
        "w2": lin(ks[5], d_ff, d_model),
        "b2": jnp.zeros((1, d_model), jnp.float32),
        "ln2_g": jnp.ones((1, d_model), jnp.float32),
        "ln2_b": jnp.zeros((1, d_model), jnp.float32),
    }


if __name__ == "__main__":
    # small shapes consistent with the module
    B, S = 2, 8
    d_model, d_k, d_v, n_heads, d_ff = 32, 8, 8, 4, 64

    key = jax.random.PRNGKey(0)
    kx, kp = jax.random.split(key)
    x = jax.random.normal(kx, (B, S, d_model), jnp.float32)
    pad_mask = jnp.ones((B, S, S), jnp.float32)   # no padding (all positions attend)

    params = init_params(kp, d_model, d_k, d_v, n_heads, d_ff)

    # TODO(synk): dropout (p=0.0 / eval mode) is a no-op and intentionally omitted.
    out = encoder_block(x, pad_mask, params, n_heads=n_heads, d_k=d_k, d_v=d_v)
    out = jax.block_until_ready(out)

    assert out.shape == (B, S, d_model)
    assert jnp.all(jnp.isfinite(out))
    print("KERNEL_OK")
</pallas_src>

<mosaic_0001>
module attributes {stable_mosaic.version = 11 : i64} {
  func.func @encoder_block_kernel(%arg0: i32, %arg1: i32, %arg2: memref<1x8x32xf32, #tpu.memory_space<vmem>>, %arg3: memref<1x8x32xf32, #tpu.memory_space<vmem>>, %arg4: memref<1x8x8xf32, #tpu.memory_space<vmem>>, %arg5: memref<32x32xbf16, #tpu.memory_space<vmem>>, %arg6: memref<1x32xf32, #tpu.memory_space<vmem>>, %arg7: memref<32x32xbf16, #tpu.memory_space<vmem>>, %arg8: memref<1x32xf32, #tpu.memory_space<vmem>>, %arg9: memref<32x32xbf16, #tpu.memory_space<vmem>>, %arg10: memref<1x32xf32, #tpu.memory_space<vmem>>, %arg11: memref<32x32xbf16, #tpu.memory_space<vmem>>, %arg12: memref<1x32xf32, #tpu.memory_space<vmem>>, %arg13: memref<1x32xf32, #tpu.memory_space<vmem>>, %arg14: memref<1x32xf32, #tpu.memory_space<vmem>>, %arg15: memref<32x64xbf16, #tpu.memory_space<vmem>>, %arg16: memref<1x64xf32, #tpu.memory_space<vmem>>, %arg17: memref<64x32xbf16, #tpu.memory_space<vmem>>, %arg18: memref<1x32xf32, #tpu.memory_space<vmem>>, %arg19: memref<1x32xf32, #tpu.memory_space<vmem>>, %arg20: memref<1x32xf32, #tpu.memory_space<vmem>>, %arg21: memref<1x8x32xf32, #tpu.memory_space<vmem>>) attributes {dimension_semantics = [#tpu.dimension_semantics<parallel>, #tpu.dimension_semantics<parallel>], iteration_bounds = array<i64: 2, 1>, scalar_prefetch = 0 : i64, scratch_operands = 0 : i64, tpu.core_type = #tpu.core_type<tc>, window_params = [{transform_indices = @transform_0, window_bounds = array<i64: 1, 8, 32>}, {transform_indices = @transform_1, window_bounds = array<i64: 1, 8, 32>}, {transform_indices = @transform_2, window_bounds = array<i64: 1, 8, 8>}, {pipeline_mode = #tpu.pipeline_mode<synchronous>, transform_indices = @transform_3, window_bounds = array<i64: 32, 32>}, {pipeline_mode = #tpu.pipeline_mode<synchronous>, transform_indices = @transform_4, window_bounds = array<i64: 1, 32>}, {pipeline_mode = #tpu.pipeline_mode<synchronous>, transform_indices = @transform_5, window_bounds = array<i64: 32, 32>}, {pipeline_mode = #tpu.pipeline_mode<synchronous>, transform_indices = @transform_6, window_bounds = array<i64: 1, 32>}, {pipeline_mode = #tpu.pipeline_mode<synchronous>, transform_indices = @transform_7, window_bounds = array<i64: 32, 32>}, {pipeline_mode = #tpu.pipeline_mode<synchronous>, transform_indices = @transform_8, window_bounds = array<i64: 1, 32>}, {pipeline_mode = #tpu.pipeline_mode<synchronous>, transform_indices = @transform_9, window_bounds = array<i64: 32, 32>}, {pipeline_mode = #tpu.pipeline_mode<synchronous>, transform_indices = @transform_10, window_bounds = array<i64: 1, 32>}, {pipeline_mode = #tpu.pipeline_mode<synchronous>, transform_indices = @transform_11, window_bounds = array<i64: 1, 32>}, {pipeline_mode = #tpu.pipeline_mode<synchronous>, transform_indices = @transform_12, window_bounds = array<i64: 1, 32>}, {pipeline_mode = #tpu.pipeline_mode<synchronous>, transform_indices = @transform_13, window_bounds = array<i64: 32, 64>}, {pipeline_mode = #tpu.pipeline_mode<synchronous>, transform_indices = @transform_14, window_bounds = array<i64: 1, 64>}, {pipeline_mode = #tpu.pipeline_mode<synchronous>, transform_indices = @transform_15, window_bounds = array<i64: 64, 32>}, {pipeline_mode = #tpu.pipeline_mode<synchronous>, transform_indices = @transform_16, window_bounds = array<i64: 1, 32>}, {pipeline_mode = #tpu.pipeline_mode<synchronous>, transform_indices = @transform_17, window_bounds = array<i64: 1, 32>}, {pipeline_mode = #tpu.pipeline_mode<synchronous>, transform_indices = @transform_18, window_bounds = array<i64: 1, 32>}, {transform_indices = @transform_19, window_bounds = array<i64: 1, 8, 32>}]} {
    %c0 = arith.constant 0 : index
    %c0_0 = arith.constant 0 : index
    %c0_1 = arith.constant 0 : index
    %0 = vector.load %arg2[%c0, %c0_0, %c0_1] : memref<1x8x32xf32, #tpu.memory_space<vmem>>, vector<1x8x32xf32>
    %1 = vector.shape_cast %0 : vector<1x8x32xf32> to vector<8x32xf32>
    %c0_2 = arith.constant 0 : index
    %c0_3 = arith.constant 0 : index
    %c0_4 = arith.constant 0 : index
    %2 = vector.load %arg3[%c0_2, %c0_3, %c0_4] : memref<1x8x32xf32, #tpu.memory_space<vmem>>, vector<1x8x32xf32>
    %3 = vector.shape_cast %2 : vector<1x8x32xf32> to vector<8x32xf32>
    %c0_5 = arith.constant 0 : index
    %c0_6 = arith.constant 0 : index
    %c0_7 = arith.constant 0 : index
    %4 = vector.load %arg4[%c0_5, %c0_6, %c0_7] : memref<1x8x8xf32, #tpu.memory_space<vmem>>, vector<1x8x8xf32>
    %5 = vector.shape_cast %4 : vector<1x8x8xf32> to vector<8x8xf32>
    %6 = arith.truncf %1 : vector<8x32xf32> to vector<8x32xbf16>
    %7 = arith.truncf %3 : vector<8x32xf32> to vector<8x32xbf16>
    %c0_8 = arith.constant 0 : index
    %c0_9 = arith.constant 0 : index
    %8 = vector.load %arg5[%c0_8, %c0_9] : memref<32x32xbf16, #tpu.memory_space<vmem>>, vector<32x32xbf16>
    %cst = arith.constant dense<0.000000e+00> : vector<8x32xf32>
    %9 = tpu.matmul %6, %8, %cst {dimension_numbers = #tpu.dot_dimension_numbers<[1], [0], [0], [1], [0, 0, 1, 1], [], []>} : vector<8x32xbf16>, vector<32x32xbf16>, vector<8x32xf32> -> vector<8x32xf32>
    %c0_10 = arith.constant 0 : index
    %c0_11 = arith.constant 0 : index
    %10 = vector.load %arg6[%c0_10, %c0_11] : memref<1x32xf32, #tpu.memory_space<vmem>>, vector<1x32xf32>
    %11 = vector.broadcast %10 : vector<1x32xf32> to vector<8x32xf32>
    %12 = arith.addf %9, %11 : vector<8x32xf32>
    %c0_12 = arith.constant 0 : index
    %c0_13 = arith.constant 0 : index
    %13 = vector.load %arg7[%c0_12, %c0_13] : memref<32x32xbf16, #tpu.memory_space<vmem>>, vector<32x32xbf16>
    %cst_14 = arith.constant dense<0.000000e+00> : vector<8x32xf32>
    %14 = tpu.matmul %7, %13, %cst_14 {dimension_numbers = #tpu.dot_dimension_numbers<[1], [0], [0], [1], [0, 0, 1, 1], [], []>} : vector<8x32xbf16>, vector<32x32xbf16>, vector<8x32xf32> -> vector<8x32xf32>
    %c0_15 = arith.constant 0 : index
    %c0_16 = arith.constant 0 : index
    %15 = vector.load %arg8[%c0_15, %c0_16] : memref<1x32xf32, #tpu.memory_space<vmem>>, vector<1x32xf32>
    %16 = vector.broadcast %15 : vector<1x32xf32> to vector<8x32xf32>
    %17 = arith.addf %14, %16 : vector<8x32xf32>
    %c0_17 = arith.constant 0 : index
    %c0_18 = arith.constant 0 : index
    %18 = vector.load %arg9[%c0_17, %c0_18] : memref<32x32xbf16, #tpu.memory_space<vmem>>, vector<32x32xbf16>
    %cst_19 = arith.constant dense<0.000000e+00> : vector<8x32xf32>
    %19 = tpu.matmul %7, %18, %cst_19 {dimension_numbers = #tpu.dot_dimension_numbers<[1], [0], [0], [1], [0, 0, 1, 1], [], []>} : vector<8x32xbf16>, vector<32x32xbf16>, vector<8x32xf32> -> vector<8x32xf32>
    %c0_20 = arith.constant 0 : index
    %c0_21 = arith.constant 0 : index
    %20 = vector.load %arg10[%c0_20, %c0_21] : memref<1x32xf32, #tpu.memory_space<vmem>>, vector<1x32xf32>
    %21 = vector.broadcast %20 : vector<1x32xf32> to vector<8x32xf32>
    %22 = arith.addf %19, %21 : vector<8x32xf32>
    %23 = vector.shape_cast %12 : vector<8x32xf32> to vector<8x4x8xf32>
    %24 = tpu.transpose %23, [1, 0, 2] : vector<8x4x8xf32> -> vector<4x8x8xf32>
    %25 = arith.truncf %24 : vector<4x8x8xf32> to vector<4x8x8xbf16>
    %26 = vector.shape_cast %17 : vector<8x32xf32> to vector<8x4x8xf32>
    %27 = tpu.transpose %26, [1, 0, 2] : vector<8x4x8xf32> -> vector<4x8x8xf32>
    %28 = arith.truncf %27 : vector<4x8x8xf32> to vector<4x8x8xbf16>
    %29 = vector.shape_cast %22 : vector<8x32xf32> to vector<8x4x8xf32>
    %30 = tpu.transpose %29, [1, 0, 2] : vector<8x4x8xf32> -> vector<4x8x8xf32>
    %31 = arith.truncf %30 : vector<4x8x8xf32> to vector<4x8x8xbf16>
    "tpu.trace_start"() <{level = 10 : i32, message = "hqd,hkd->hqk"}> : () -> ()
    %cst_22 = arith.constant dense<0.000000e+00> : vector<4x8x8xf32>
    %32 = tpu.matmul %25, %28, %cst_22 {dimension_numbers = #tpu.dot_dimension_numbers<[2], [2], [1], [1], [0, 0, 0, 1, 1, 1], [0], [0]>} : vector<4x8x8xbf16>, vector<4x8x8xbf16>, vector<4x8x8xf32> -> vector<4x8x8xf32>
    "tpu.trace_stop"() : () -> ()
    %cst_23 = arith.constant 0.353553385 : f32
    %33 = vector.broadcast %cst_23 : f32 to vector<4x8x8xf32>
    %34 = arith.mulf %32, %33 : vector<4x8x8xf32>
    %35 = vector.shape_cast %5 : vector<8x8xf32> to vector<1x8x8xf32>
    %cst_24 = arith.constant 0.000000e+00 : f32
    %36 = vector.broadcast %cst_24 : f32 to vector<1x8x8xf32>
    %37 = arith.cmpf ogt, %35, %36 : vector<1x8x8xf32>
    %cst_25 = arith.constant -1.000000e+09 : f32
    %38 = vector.shape_cast %37 : vector<1x8x8xi1> to vector<1x8x8xi1>
    %39 = vector.broadcast %38 : vector<1x8x8xi1> to vector<4x8x8xi1>
    %40 = vector.broadcast %cst_25 : f32 to vector<4x8x8xf32>
    %41 = arith.select %39, %34, %40 : vector<4x8x8xi1>, vector<4x8x8xf32>
    %cst_26 = arith.constant dense<0xFF800000> : vector<4x8xf32>
    %42 = vector.multi_reduction <maximumf>, %41, %cst_26 [2] : vector<4x8x8xf32> to vector<4x8xf32>
    %43 = vector.shape_cast %42 : vector<4x8xf32> to vector<4x8x1xf32>
    %44 = vector.broadcast %43 : vector<4x8x1xf32> to vector<4x8x8xf32>
    %45 = arith.subf %41, %44 : vector<4x8x8xf32>
    %46 = math.exp %45 : vector<4x8x8xf32>
    %cst_27 = arith.constant dense<0.000000e+00> : vector<4x8xf32>
    %47 = vector.multi_reduction <add>, %46, %cst_27 [2] : vector<4x8x8xf32> to vector<4x8xf32>
    %48 = vector.shape_cast %47 : vector<4x8xf32> to vector<4x8x1xf32>
    %49 = tpu.reciprocal %48 {approx = true} : vector<4x8x1xf32> -> vector<4x8x1xf32>
    %50 = vector.broadcast %49 : vector<4x8x1xf32> to vector<4x8x8xf32>
    %51 = arith.mulf %46, %50 : vector<4x8x8xf32>
    %52 = arith.truncf %51 : vector<4x8x8xf32> to vector<4x8x8xbf16>
    "tpu.trace_start"() <{level = 10 : i32, message = "hqk,hkv->hqv"}> : () -> ()
    %cst_28 = arith.constant dense<0.000000e+00> : vector<4x8x8xf32>
    %53 = tpu.matmul %52, %31, %cst_28 {dimension_numbers = #tpu.dot_dimension_numbers<[2], [1], [1], [2], [0, 0, 0, 1, 1, 2], [0], [0]>} : vector<4x8x8xbf16>, vector<4x8x8xbf16>, vector<4x8x8xf32> -> vector<4x8x8xf32>
    "tpu.trace_stop"() : () -> ()
    %54 = tpu.transpose %53, [1, 0, 2] : vector<4x8x8xf32> -> vector<8x4x8xf32>
    %55 = vector.shape_cast %54 : vector<8x4x8xf32> to vector<8x32xf32>
    %56 = arith.truncf %55 : vector<8x32xf32> to vector<8x32xbf16>
    %c0_29 = arith.constant 0 : index
    %c0_30 = arith.constant 0 : index
    %57 = vector.load %arg11[%c0_29, %c0_30] : memref<32x32xbf16, #tpu.memory_space<vmem>>, vector<32x32xbf16>
    %cst_31 = arith.constant dense<0.000000e+00> : vector<8x32xf32>
    %58 = tpu.matmul %56, %57, %cst_31 {dimension_numbers = #tpu.dot_dimension_numbers<[1], [0], [0], [1], [0, 0, 1, 1], [], []>} : vector<8x32xbf16>, vector<32x32xbf16>, vector<8x32xf32> -> vector<8x32xf32>
    %c0_32 = arith.constant 0 : index
    %c0_33 = arith.constant 0 : index
    %59 = vector.load %arg12[%c0_32, %c0_33] : memref<1x32xf32, #tpu.memory_space<vmem>>, vector<1x32xf32>
    %60 = vector.broadcast %59 : vector<1x32xf32> to vector<8x32xf32>
    %61 = arith.addf %58, %60 : vector<8x32xf32>
    %62 = arith.addf %1, %61 : vector<8x32xf32>
    %c0_34 = arith.constant 0 : index
    %c0_35 = arith.constant 0 : index
    %63 = vector.load %arg13[%c0_34, %c0_35] : memref<1x32xf32, #tpu.memory_space<vmem>>, vector<1x32xf32>
    %c0_36 = arith.constant 0 : index
    %c0_37 = arith.constant 0 : index
    %64 = vector.load %arg14[%c0_36, %c0_37] : memref<1x32xf32, #tpu.memory_space<vmem>>, vector<1x32xf32>
    %cst_38 = arith.constant dense<0.000000e+00> : vector<8xf32>
    %65 = vector.multi_reduction <add>, %62, %cst_38 [1] : vector<8x32xf32> to vector<8xf32>
    %66 = vector.shape_cast %65 : vector<8xf32> to vector<8x1xf32>
    %cst_39 = arith.constant 3.200000e+01 : f32
    %67 = vector.broadcast %cst_39 : f32 to vector<8x1xf32>
    %68 = arith.divf %66, %67 : vector<8x1xf32>
    %69 = vector.broadcast %68 : vector<8x1xf32> to vector<8x32xf32>
    %70 = arith.subf %62, %69 : vector<8x32xf32>
    %71 = arith.mulf %70, %70 : vector<8x32xf32>
    %cst_40 = arith.constant dense<0.000000e+00> : vector<8xf32>
    %72 = vector.multi_reduction <add>, %71, %cst_40 [1] : vector<8x32xf32> to vector<8xf32>
    %73 = vector.shape_cast %72 : vector<8xf32> to vector<8x1xf32>
    %cst_41 = arith.constant 3.200000e+01 : f32
    %74 = vector.broadcast %cst_41 : f32 to vector<8x1xf32>
    %75 = arith.divf %73, %74 : vector<8x1xf32>
    %76 = vector.broadcast %68 : vector<8x1xf32> to vector<8x32xf32>
    %77 = arith.subf %62, %76 : vector<8x32xf32>
    %cst_42 = arith.constant 9.99999974E-6 : f32
    %78 = vector.broadcast %cst_42 : f32 to vector<8x1xf32>
    %79 = arith.addf %75, %78 : vector<8x1xf32>
    %80 = math.rsqrt %79 : vector<8x1xf32>
    %81 = vector.broadcast %80 : vector<8x1xf32> to vector<8x32xf32>
    %82 = arith.mulf %77, %81 : vector<8x32xf32>
    %83 = vector.broadcast %63 : vector<1x32xf32> to vector<8x32xf32>
    %84 = arith.mulf %82, %83 : vector<8x32xf32>
    %85 = vector.broadcast %64 : vector<1x32xf32> to vector<8x32xf32>
    %86 = arith.addf %84, %85 : vector<8x32xf32>
    %87 = arith.truncf %86 : vector<8x32xf32> to vector<8x32xbf16>
    %c0_43 = arith.constant 0 : index
    %c0_44 = arith.constant 0 : index
    %88 = vector.load %arg15[%c0_43, %c0_44] : memref<32x64xbf16, #tpu.memory_space<vmem>>, vector<32x64xbf16>
    %cst_45 = arith.constant dense<0.000000e+00> : vector<8x64xf32>
    %89 = tpu.matmul %87, %88, %cst_45 {dimension_numbers = #tpu.dot_dimension_numbers<[1], [0], [0], [1], [0, 0, 1, 1], [], []>} : vector<8x32xbf16>, vector<32x64xbf16>, vector<8x64xf32> -> vector<8x64xf32>
    %c0_46 = arith.constant 0 : index
    %c0_47 = arith.constant 0 : index
    %90 = vector.load %arg16[%c0_46, %c0_47] : memref<1x64xf32, #tpu.memory_space<vmem>>, vector<1x64xf32>
    %91 = vector.broadcast %90 : vector<1x64xf32> to vector<8x64xf32>
    %92 = arith.addf %89, %91 : vector<8x64xf32>
    %cst_48 = arith.constant 0.000000e+00 : f32
    %93 = vector.broadcast %cst_48 : f32 to vector<8x64xf32>
    %94 = arith.maximumf %92, %93 : vector<8x64xf32>
    %95 = arith.truncf %94 : vector<8x64xf32> to vector<8x64xbf16>
    %c0_49 = arith.constant 0 : index
    %c0_50 = arith.constant 0 : index
    %96 = vector.load %arg17[%c0_49, %c0_50] : memref<64x32xbf16, #tpu.memory_space<vmem>>, vector<64x32xbf16>
    %cst_51 = arith.constant dense<0.000000e+00> : vector<8x32xf32>
    %97 = tpu.matmul %95, %96, %cst_51 {dimension_numbers = #tpu.dot_dimension_numbers<[1], [0], [0], [1], [0, 0, 1, 1], [], []>} : vector<8x64xbf16>, vector<64x32xbf16>, vector<8x32xf32> -> vector<8x32xf32>
    %c0_52 = arith.constant 0 : index
    %c0_53 = arith.constant 0 : index
    %98 = vector.load %arg18[%c0_52, %c0_53] : memref<1x32xf32, #tpu.memory_space<vmem>>, vector<1x32xf32>
    %99 = vector.broadcast %98 : vector<1x32xf32> to vector<8x32xf32>
    %100 = arith.addf %97, %99 : vector<8x32xf32>
    %101 = arith.addf %86, %100 : vector<8x32xf32>
    %c0_54 = arith.constant 0 : index
    %c0_55 = arith.constant 0 : index
    %102 = vector.load %arg19[%c0_54, %c0_55] : memref<1x32xf32, #tpu.memory_space<vmem>>, vector<1x32xf32>
    %c0_56 = arith.constant 0 : index
    %c0_57 = arith.constant 0 : index
    %103 = vector.load %arg20[%c0_56, %c0_57] : memref<1x32xf32, #tpu.memory_space<vmem>>, vector<1x32xf32>
    %cst_58 = arith.constant dense<0.000000e+00> : vector<8xf32>
    %104 = vector.multi_reduction <add>, %101, %cst_58 [1] : vector<8x32xf32> to vector<8xf32>
    %105 = vector.shape_cast %104 : vector<8xf32> to vector<8x1xf32>
    %cst_59 = arith.constant 3.200000e+01 : f32
    %106 = vector.broadcast %cst_59 : f32 to vector<8x1xf32>
    %107 = arith.divf %105, %106 : vector<8x1xf32>
    %108 = vector.broadcast %107 : vector<8x1xf32> to vector<8x32xf32>
    %109 = arith.subf %101, %108 : vector<8x32xf32>
    %110 = arith.mulf %109, %109 : vector<8x32xf32>
    %cst_60 = arith.constant dense<0.000000e+00> : vector<8xf32>
    %111 = vector.multi_reduction <add>, %110, %cst_60 [1] : vector<8x32xf32> to vector<8xf32>
    %112 = vector.shape_cast %111 : vector<8xf32> to vector<8x1xf32>
    %cst_61 = arith.constant 3.200000e+01 : f32
    %113 = vector.broadcast %cst_61 : f32 to vector<8x1xf32>
    %114 = arith.divf %112, %113 : vector<8x1xf32>
    %115 = vector.broadcast %107 : vector<8x1xf32> to vector<8x32xf32>
    %116 = arith.subf %101, %115 : vector<8x32xf32>
    %cst_62 = arith.constant 9.99999974E-6 : f32
    %117 = vector.broadcast %cst_62 : f32 to vector<8x1xf32>
    %118 = arith.addf %114, %117 : vector<8x1xf32>
    %119 = math.rsqrt %118 : vector<8x1xf32>
    %120 = vector.broadcast %119 : vector<8x1xf32> to vector<8x32xf32>
    %121 = arith.mulf %116, %120 : vector<8x32xf32>
    %122 = vector.broadcast %102 : vector<1x32xf32> to vector<8x32xf32>
    %123 = arith.mulf %121, %122 : vector<8x32xf32>
    %124 = vector.broadcast %103 : vector<1x32xf32> to vector<8x32xf32>
    %125 = arith.addf %123, %124 : vector<8x32xf32>
    %c0_63 = arith.constant 0 : index
    %c0_64 = arith.constant 0 : index
    %c0_65 = arith.constant 0 : index
    %126 = vector.load %arg21[%c0_63, %c0_64, %c0_65] : memref<1x8x32xf32, #tpu.memory_space<vmem>>, vector<1x8x32xf32>
    %127 = vector.shape_cast %126 : vector<1x8x32xf32> to vector<8x32xf32>
    %128 = vector.shape_cast %125 : vector<8x32xf32> to vector<1x8x32xf32>
    tpu.vector_store %arg21[%c0_63, %c0_64, %c0_65], %128 {strides = array<i32>} : memref<1x8x32xf32, #tpu.memory_space<vmem>>, vector<1x8x32xf32>,
    return
  }
  func.func @transform_0(%arg0: i32, %arg1: i32) -> (i32, i32, i32) {
    %c0_i32 = arith.constant 0 : i32
    %c0_i32_0 = arith.constant 0 : i32
    return %arg0, %arg1, %c0_i32 : i32, i32, i32
  }
  func.func @transform_1(%arg0: i32, %arg1: i32) -> (i32, i32, i32) {
    %c0_i32 = arith.constant 0 : i32
    %c0_i32_0 = arith.constant 0 : i32
    %c0_i32_1 = arith.constant 0 : i32
    return %arg0, %c0_i32, %c0_i32_0 : i32, i32, i32
  }
  func.func @transform_2(%arg0: i32, %arg1: i32) -> (i32, i32, i32) {
    %c0_i32 = arith.constant 0 : i32
    %c0_i32_0 = arith.constant 0 : i32
    return %arg0, %arg1, %c0_i32 : i32, i32, i32
  }
  func.func @transform_3(%arg0: i32, %arg1: i32) -> (i32, i32) {
    %c0_i32 = arith.constant 0 : i32
    %c0_i32_0 = arith.constant 0 : i32
    %c0_i32_1 = arith.constant 0 : i32
    return %c0_i32, %c0_i32_0 : i32, i32
  }
  func.func @transform_4(%arg0: i32, %arg1: i32) -> (i32, i32) {
    %c0_i32 = arith.constant 0 : i32
    %c0_i32_0 = arith.constant 0 : i32
    %c0_i32_1 = arith.constant 0 : i32
    return %c0_i32, %c0_i32_0 : i32, i32
  }
  func.func @transform_5(%arg0: i32, %arg1: i32) -> (i32, i32) {
    %c0_i32 = arith.constant 0 : i32
    %c0_i32_0 = arith.constant 0 : i32
    %c0_i32_1 = arith.constant 0 : i32
    return %c0_i32, %c0_i32_0 : i32, i32
  }
  func.func @transform_6(%arg0: i32, %arg1: i32) -> (i32, i32) {
    %c0_i32 = arith.constant 0 : i32
    %c0_i32_0 = arith.constant 0 : i32
    %c0_i32_1 = arith.constant 0 : i32
    return %c0_i32, %c0_i32_0 : i32, i32
  }
  func.func @transform_7(%arg0: i32, %arg1: i32) -> (i32, i32) {
    %c0_i32 = arith.constant 0 : i32
    %c0_i32_0 = arith.constant 0 : i32
    %c0_i32_1 = arith.constant 0 : i32
    return %c0_i32, %c0_i32_0 : i32, i32
  }
  func.func @transform_8(%arg0: i32, %arg1: i32) -> (i32, i32) {
    %c0_i32 = arith.constant 0 : i32
    %c0_i32_0 = arith.constant 0 : i32
    %c0_i32_1 = arith.constant 0 : i32
    return %c0_i32, %c0_i32_0 : i32, i32
  }
  func.func @transform_9(%arg0: i32, %arg1: i32) -> (i32, i32) {
    %c0_i32 = arith.constant 0 : i32
    %c0_i32_0 = arith.constant 0 : i32
    %c0_i32_1 = arith.constant 0 : i32
    return %c0_i32, %c0_i32_0 : i32, i32
  }
  func.func @transform_10(%arg0: i32, %arg1: i32) -> (i32, i32) {
    %c0_i32 = arith.constant 0 : i32
    %c0_i32_0 = arith.constant 0 : i32
    %c0_i32_1 = arith.constant 0 : i32
    return %c0_i32, %c0_i32_0 : i32, i32
  }
  func.func @transform_11(%arg0: i32, %arg1: i32) -> (i32, i32) {
    %c0_i32 = arith.constant 0 : i32
    %c0_i32_0 = arith.constant 0 : i32
    %c0_i32_1 = arith.constant 0 : i32
    return %c0_i32, %c0_i32_0 : i32, i32
  }
  func.func @transform_12(%arg0: i32, %arg1: i32) -> (i32, i32) {
    %c0_i32 = arith.constant 0 : i32
    %c0_i32_0 = arith.constant 0 : i32
    %c0_i32_1 = arith.constant 0 : i32
    return %c0_i32, %c0_i32_0 : i32, i32
  }
  func.func @transform_13(%arg0: i32, %arg1: i32) -> (i32, i32) {
    %c0_i32 = arith.constant 0 : i32
    %c0_i32_0 = arith.constant 0 : i32
    %c0_i32_1 = arith.constant 0 : i32
    return %c0_i32, %c0_i32_0 : i32, i32
  }
  func.func @transform_14(%arg0: i32, %arg1: i32) -> (i32, i32) {
    %c0_i32 = arith.constant 0 : i32
    %c0_i32_0 = arith.constant 0 : i32
    %c0_i32_1 = arith.constant 0 : i32
    return %c0_i32, %c0_i32_0 : i32, i32
  }
  func.func @transform_15(%arg0: i32, %arg1: i32) -> (i32, i32) {
    %c0_i32 = arith.constant 0 : i32
    %c0_i32_0 = arith.constant 0 : i32
    %c0_i32_1 = arith.constant 0 : i32
    return %c0_i32, %c0_i32_0 : i32, i32
  }
  func.func @transform_16(%arg0: i32, %arg1: i32) -> (i32, i32) {
    %c0_i32 = arith.constant 0 : i32
    %c0_i32_0 = arith.constant 0 : i32
    %c0_i32_1 = arith.constant 0 : i32
    return %c0_i32, %c0_i32_0 : i32, i32
  }
  func.func @transform_17(%arg0: i32, %arg1: i32) -> (i32, i32) {
    %c0_i32 = arith.constant 0 : i32
    %c0_i32_0 = arith.constant 0 : i32
    %c0_i32_1 = arith.constant 0 : i32
    return %c0_i32, %c0_i32_0 : i32, i32
  }
  func.func @transform_18(%arg0: i32, %arg1: i32) -> (i32, i32) {
    %c0_i32 = arith.constant 0 : i32
    %c0_i32_0 = arith.constant 0 : i32
    %c0_i32_1 = arith.constant 0 : i32
    return %c0_i32, %c0_i32_0 : i32, i32
  }
  func.func @transform_19(%arg0: i32, %arg1: i32) -> (i32, i32, i32) {
    %c0_i32 = arith.constant 0 : i32
    %c0_i32_0 = arith.constant 0 : i32
    return %arg0, %arg1, %c0_i32 : i32, i32, i32
  }
}

</mosaic_0001>

<llo_original>
// kernel: tpu_custom_call.1
$region0: #{tpu_custom_call.1}
  #allocation0 [shape = 'u32[]', space=smem, size = 0x4, offset = 0x4, fixed_abs, tag = 'smem constant byte address 0x4 - core index']
  #allocation1 [shape = 'u32[144,128]{1,0:T(1,128)}', space=vmem, size = 0x12000, scoped, tag = 'internal scratch']
  %s0 = inlined_call_operand.hbm [shape: f32[2,8,32], index: 0, kind: input, shape index: {}]
  %s1 = inlined_call_operand.hbm [shape: f32[2,8,32], index: 1, kind: input, shape index: {}]
  %s2 = inlined_call_operand.hbm [shape: f32[2,8,8], index: 2, kind: input, shape index: {}]
  %s3 = inlined_call_operand.hbm [shape: bf16[32,32], index: 3, kind: input, shape index: {}]
  %s4 = inlined_call_operand.hbm [shape: f32[1,32], index: 4, kind: input, shape index: {}]
  %s5 = inlined_call_operand.hbm [shape: bf16[32,32], index: 5, kind: input, shape index: {}]
  %s6 = inlined_call_operand.hbm [shape: f32[1,32], index: 6, kind: input, shape index: {}]
  %s7 = inlined_call_operand.hbm [shape: bf16[32,32], index: 7, kind: input, shape index: {}]
  %s8 = inlined_call_operand.hbm [shape: f32[1,32], index: 8, kind: input, shape index: {}]
  %s9 = inlined_call_operand.hbm [shape: bf16[32,32], index: 9, kind: input, shape index: {}]
  %s10 = inlined_call_operand.hbm [shape: f32[1,32], index: 10, kind: input, shape index: {}]
  %s11 = inlined_call_operand.hbm [shape: f32[1,32], index: 11, kind: input, shape index: {}]
  %s12 = inlined_call_operand.hbm [shape: f32[1,32], index: 12, kind: input, shape index: {}]
  %s13 = inlined_call_operand.hbm [shape: bf16[32,64], index: 13, kind: input, shape index: {}]
  %s14 = inlined_call_operand.hbm [shape: f32[1,64], index: 14, kind: input, shape index: {}]
  %s15 = inlined_call_operand.hbm [shape: bf16[64,32], index: 15, kind: input, shape index: {}]
  %s16 = inlined_call_operand.hbm [shape: f32[1,32], index: 16, kind: input, shape index: {}]
  %s17 = inlined_call_operand.hbm [shape: f32[1,32], index: 17, kind: input, shape index: {}]
  %s18 = inlined_call_operand.hbm [shape: f32[1,32], index: 18, kind: input, shape index: {}]
  %s19 = inlined_call_operand.hbm [shape: f32[2,8,32], index: 19, kind: output, shape index: {}]
  %s20 = sld [smem:[#allocation0]]
  $region185: #{tpu_custom_call.1} parent=0
    _
  %s22 = ssub.s32 1, %s20
  %s23 = scalar_select 0, %s22, %s20
  $region1: #{tpu_custom_call.1} parent=0
    #allocation2 [shape = 'u8[8192]{0}', space=vmem, size = 0x2000, scoped, tag = 'input window, operand 0']
    #allocation3 [shape = 's32[2]{0}', space=sflag, size = 0x8, scoped, tag = 'scoped memory for tpu_custom_call.1']
    #allocation4 [shape = 's32[2]{0}', space=sflag, size = 0x8, scoped, tag = 'scoped memory for tpu_custom_call.1']
    #allocation5 [shape = 'u8[8192]{0}', space=vmem, size = 0x2000, scoped, tag = 'input window, operand 1']
    #allocation6 [shape = 's32[2]{0}', space=sflag, size = 0x8, scoped, tag = 'scoped memory for tpu_custom_call.1']
    #allocation7 [shape = 'u8[8192]{0}', space=vmem, size = 0x2000, scoped, tag = 'input window, operand 2']
    #allocation8 [shape = 'u8[8192]{0}', space=vmem, size = 0x2000, scoped, tag = 'input window, operand 3, single buffered']
    #allocation9 [shape = 's32[1]{0}', space=sflag, size = 0x4, scoped, tag = 'scoped memory for tpu_custom_call.1']
    #allocation10 [shape = 'u8[512]{0}', space=vmem, size = 0x400, scoped, tag = 'input window, operand 4, single buffered']
    #allocation11 [shape = 'u8[8192]{0}', space=vmem, size = 0x2000, scoped, tag = 'input window, operand 5, single buffered']
    #allocation12 [shape = 's32[1]{0}', space=sflag, size = 0x4, scoped, tag = 'scoped memory for tpu_custom_call.1']
    #allocation13 [shape = 'u8[512]{0}', space=vmem, size = 0x400, scoped, tag = 'input window, operand 6, single buffered']
    #allocation14 [shape = 'u8[8192]{0}', space=vmem, size = 0x2000, scoped, tag = 'input window, operand 7, single buffered']
    #allocation15 [shape = 's32[1]{0}', space=sflag, size = 0x4, scoped, tag = 'scoped memory for tpu_custom_call.1']
    #allocation16 [shape = 'u8[512]{0}', space=vmem, size = 0x400, scoped, tag = 'input window, operand 8, single buffered']
    #allocation17 [shape = 'u8[8192]{0}', space=vmem, size = 0x2000, scoped, tag = 'input window, operand 9, single buffered']
    #allocation18 [shape = 's32[1]{0}', space=sflag, size = 0x4, scoped, tag = 'scoped memory for tpu_custom_call.1']
    #allocation19 [shape = 'u8[512]{0}', space=vmem, size = 0x400, scoped, tag = 'input window, operand 10, single buffered']
    #allocation20 [shape = 'u8[512]{0}', space=vmem, size = 0x400, scoped, tag = 'input window, operand 11, single buffered']
    #allocation21 [shape = 's32[1]{0}', space=sflag, size = 0x4, scoped, tag = 'scoped memory for tpu_custom_call.1']
    #allocation22 [shape = 'u8[512]{0}', space=vmem, size = 0x400, scoped, tag = 'input window, operand 12, single buffered']
    #allocation23 [shape = 'u8[8192]{0}', space=vmem, size = 0x2000, scoped, tag = 'input window, operand 13, single buffered']
    #allocation24 [shape = 's32[1]{0}', space=sflag, size = 0x4, scoped, tag = 'scoped memory for tpu_custom_call.1']
    #allocation25 [shape = 'u8[512]{0}', space=vmem, size = 0x400, scoped, tag = 'input window, operand 14, single buffered']
    #allocation26 [shape = 'u8[16384]{0}', space=vmem, size = 0x4000, scoped, tag = 'input window, operand 15, single buffered']
    #allocation27 [shape = 's32[1]{0}', space=sflag, size = 0x4, scoped, tag = 'scoped memory for tpu_custom_call.1']
    #allocation28 [shape = 'u8[512]{0}', space=vmem, size = 0x400, scoped, tag = 'input window, operand 16, single buffered']
    #allocation29 [shape = 'u8[512]{0}', space=vmem, size = 0x400, scoped, tag = 'input window, operand 17, single buffered']
    #allocation30 [shape = 's32[1]{0}', space=sflag, size = 0x4, scoped, tag = 'scoped memory for tpu_custom_call.1']
    #allocation31 [shape = 'u8[512]{0}', space=vmem, size = 0x400, scoped, tag = 'input window, operand 18, single buffered']
    #allocation32 [shape = 'u8[8192]{0}', space=vmem, size = 0x2000, scoped, tag = 'output window, operand 0']
    %24 = vsyncpa [#allocation3], 0
    %s25 = scalar_lea.sflag [#allocation3], 1
    %26 = vsyncpa %s25, 0
    %27 = vsyncpa [#allocation6], 0
    %s28 = scalar_lea.sflag [#allocation6], 1
    %29 = vsyncpa %s28, 0
    %30 = vsyncpa [#allocation9], 0
    %31 = vsyncpa [#allocation12], 0
    %32 = vsyncpa [#allocation15], 0
    %33 = vsyncpa [#allocation18], 0
    %34 = vsyncpa [#allocation21], 0
    %35 = vsyncpa [#allocation24], 0
    %36 = vsyncpa [#allocation27], 0
    %37 = vsyncpa [#allocation30], 0
    %38 = vsyncpa [#allocation4], 0
    %s39 = scalar_lea.sflag [#allocation4], 1
    %40 = vsyncpa %s39, 0
    loop: start=0, step=1, limit=4
    $region2: #{tpu_custom_call.1} parent=1 // loop_pre_header
      _
    $region3: #{tpu_custom_call.1} parent=1 // loop_header
      %s42 = sphi 0, %s46
      %p43 = scmp.ge.s32.totalorder %s42, 4
      %s49 = sphi 0, %s61
      %s50 = sphi 0, %s57
      %s51 = sphi 0, %s49
      %s52 = sphi 0, %s50
      %s53 = sphi 0, %s51
      %s54 = sphi 0, %s52
      %s66 = sphi 0, %s68
      %s69 = sphi 0, %s66
      %s70 = sphi 0, %s69
      %s86 = sphi 0, %s70
      %s92 = sphi 0, %s94
      %s95 = sphi 0, %s92
      %s96 = sphi 0, %s95
      %s112 = sphi 0, %s96
      %s120 = sphi 0, %s122
      %s123 = sphi 0, %s120
      %s124 = sphi 0, %s123
      %s140 = sphi 0, %s124
      %s144 = sphi 0, %s144
      %s146 = sphi 0, %s144
      %s147 = sphi 0, %s146
      %s161 = sphi 0, %s147
      %s165 = sphi 0, %s165
      %s167 = sphi 0, %s165
      %s168 = sphi 0, %s167
      %s182 = sphi 0, %s168
      %s186 = sphi 0, %s186
      %s188 = sphi 0, %s186
      %s189 = sphi 0, %s188
      %s203 = sphi 0, %s189
      %s207 = sphi 0, %s207
      %s209 = sphi 0, %s207
      %s210 = sphi 0, %s209
      %s224 = sphi 0, %s210
      %s228 = sphi 0, %s228
      %s230 = sphi 0, %s228
      %s231 = sphi 0, %s230
      %s245 = sphi 0, %s231
      %s249 = sphi 0, %s249
      %s251 = sphi 0, %s249
      %s252 = sphi 0, %s251
      %s266 = sphi 0, %s252
      %s270 = sphi 0, %s270
      %s272 = sphi 0, %s270
      %s273 = sphi 0, %s272
      %s287 = sphi 0, %s273
      %s291 = sphi 0, %s291
      %s293 = sphi 0, %s291
      %s294 = sphi 0, %s293
      %s308 = sphi 0, %s294
      %s312 = sphi 0, %s312
      %s314 = sphi 0, %s312
      %s315 = sphi 0, %s314
      %s329 = sphi 0, %s315
      %s333 = sphi 0, %s333
      %s335 = sphi 0, %s333
      %s336 = sphi 0, %s335
      %s350 = sphi 0, %s336
      %s354 = sphi 0, %s354
      %s356 = sphi 0, %s354
      %s357 = sphi 0, %s356
      %s371 = sphi 0, %s357
      %s375 = sphi 0, %s375
      %s377 = sphi 0, %s375
      %s378 = sphi 0, %s377
      %s392 = sphi 0, %s378
      %s396 = sphi 0, %s396
      %s398 = sphi 0, %s396
      %s399 = sphi 0, %s398
      %s413 = sphi 0, %s399
      %s417 = sphi 0, %s417
      %s419 = sphi 0, %s417
      %s420 = sphi 0, %s419
      %s434 = sphi 0, %s420
      %s438 = sphi 0, %s438
      %s440 = sphi 0, %s438
      %s441 = sphi 0, %s440
      %s455 = sphi 0, %s441
      %s459 = sphi 0, %s459
      %s461 = sphi 0, %s459
      %s462 = sphi 0, %s461
      %s476 = sphi 0, %s462
      %s484 = sphi 0, %s486
      %s487 = sphi 0, %s484
      %s488 = sphi 0, %s487
      %s504 = sphi 0, %s488
    $region4: #{tpu_custom_call.1} parent=1 // loop_header_branch
      %45 = sbr.rel (%p43) target = $region8
    $region5: #{tpu_custom_call.1} parent=1 // loop_body
      %s47 = ssub.s32 %s42, 1
      %s48 = ssub.s32 %s42, 2
      %s55 = sadd.s32 1, %s50
      %p56 = scmp.ge.s32.totalorder %s55, 1
      %s57 = scalar_select %p56, 0, %s55
      %s58 = sadd.s32 1, %s49
      %s59 = scalar_select %p56, %s58, %s49
      %p60 = scmp.ge.s32.totalorder %s59, 2
      %s61 = scalar_select %p60, 0, %s59
      %s62 = ssub.s32 %s49, %s61
      %s63 = ssub.s32 %s50, %s57
      %s64 = sor.u32 %s62, %s63
      %p65 = scmp.eq.s32.totalorder %s64, 0
      %s67 = sadd.s32 %s66, 1
      %s68 = scalar_select %p65, %s66, %s67
      %p71 = pneg %p65
      %p72 = scmp.eq.s32.totalorder %s42, 1
      %p73 = por %p71, %p72
      %p74 = scmp.ne.s32.totalorder %s66, %s69
      %p75 = scmp.eq.s32.totalorder %s42, 0
      %p76 = por %p74, %p75
      %p77 = scmp.ne.s32.totalorder %s66, %s69
      %p78 = scmp.eq.s32.totalorder %s47, 1
      %p79 = por %p77, %p78
      %p80 = scmp.ne.s32.totalorder %s69, %s70
      %p81 = scmp.eq.s32.totalorder %s47, 0
      %p82 = por %p80, %p81
      %p83 = scmp.ne.s32.totalorder %s69, %s70
      %p84 = scmp.eq.s32.totalorder %s48, 1
      %p85 = por %p83, %p84
      %p87 = scmp.ne.s32.totalorder %s70, %s86
      %p88 = scmp.eq.s32.totalorder %s48, 0
      %p89 = por %p87, %p88
      %s90 = ssub.s32 %s49, %s61
      %p91 = scmp.eq.s32.totalorder %s90, 0
      %s93 = sadd.s32 %s92, 1
      %s94 = scalar_select %p91, %s92, %s93
      %p97 = pneg %p91
      %p98 = scmp.eq.s32.totalorder %s42, 1
      %p99 = por %p97, %p98
      %p100 = scmp.ne.s32.totalorder %s92, %s95
      %p101 = scmp.eq.s32.totalorder %s42, 0
      %p102 = por %p100, %p101
      %p103 = scmp.ne.s32.totalorder %s92, %s95
      %p104 = scmp.eq.s32.totalorder %s47, 1
      %p105 = por %p103, %p104
      %p106 = scmp.ne.s32.totalorder %s95, %s96
      %p107 = scmp.eq.s32.totalorder %s47, 0
      %p108 = por %p106, %p107
      %p109 = scmp.ne.s32.totalorder %s95, %s96
      %p110 = scmp.eq.s32.totalorder %s48, 1
      %p111 = por %p109, %p110
      %p113 = scmp.ne.s32.totalorder %s96, %s112
      %p114 = scmp.eq.s32.totalorder %s48, 0
      %p115 = por %p113, %p114
      %s116 = ssub.s32 %s49, %s61
      %s117 = ssub.s32 %s50, %s57
      %s118 = sor.u32 %s116, %s117
      %p119 = scmp.eq.s32.totalorder %s118, 0
      %s121 = sadd.s32 %s120, 1
      %s122 = scalar_select %p119, %s120, %s121
      %p125 = pneg %p119
      %p126 = scmp.eq.s32.totalorder %s42, 1
      %p127 = por %p125, %p126
      %p128 = scmp.ne.s32.totalorder %s120, %s123
      %p129 = scmp.eq.s32.totalorder %s42, 0
      %p130 = por %p128, %p129
      %p131 = scmp.ne.s32.totalorder %s120, %s123
      %p132 = scmp.eq.s32.totalorder %s47, 1
      %p133 = por %p131, %p132
      %p134 = scmp.ne.s32.totalorder %s123, %s124
      %p135 = scmp.eq.s32.totalorder %s47, 0
      %p136 = por %p134, %p135
      %p137 = scmp.ne.s32.totalorder %s123, %s124
      %p138 = scmp.eq.s32.totalorder %s48, 1
      %p139 = por %p137, %p138
      %p141 = scmp.ne.s32.totalorder %s124, %s140
      %p142 = scmp.eq.s32.totalorder %s48, 0
      %p143 = por %p141, %p142
      %s145 = sadd.s32 %s144, 1
      %p148 = scmp.eq.s32.totalorder %s42, 1
      %p149 = scmp.ne.s32.totalorder %s144, %s146
      %p150 = scmp.eq.s32.totalorder %s42, 0
      %p151 = por %p149, %p150
      %p152 = scmp.ne.s32.totalorder %s144, %s146
      %p153 = scmp.eq.s32.totalorder %s47, 1
      %p154 = por %p152, %p153
      %p155 = scmp.ne.s32.totalorder %s146, %s147
      %p156 = scmp.eq.s32.totalorder %s47, 0
      %p157 = por %p155, %p156
      %p158 = scmp.ne.s32.totalorder %s146, %s147
      %p159 = scmp.eq.s32.totalorder %s48, 1
      %p160 = por %p158, %p159
      %p162 = scmp.ne.s32.totalorder %s147, %s161
      %p163 = scmp.eq.s32.totalorder %s48, 0
      %p164 = por %p162, %p163
      %s166 = sadd.s32 %s165, 1
      %p169 = scmp.eq.s32.totalorder %s42, 1
      %p170 = scmp.ne.s32.totalorder %s165, %s167
      %p171 = scmp.eq.s32.totalorder %s42, 0
      %p172 = por %p170, %p171
      %p173 = scmp.ne.s32.totalorder %s165, %s167
      %p174 = scmp.eq.s32.totalorder %s47, 1
      %p175 = por %p173, %p174
      %p176 = scmp.ne.s32.totalorder %s167, %s168
      %p177 = scmp.eq.s32.totalorder %s47, 0
      %p178 = por %p176, %p177
      %p179 = scmp.ne.s32.totalorder %s167, %s168
      %p180 = scmp.eq.s32.totalorder %s48, 1
      %p181 = por %p179, %p180
      %p183 = scmp.ne.s32.totalorder %s168, %s182
      %p184 = scmp.eq.s32.totalorder %s48, 0
      %p185 = por %p183, %p184
      %s187 = sadd.s32 %s186, 1
      %p190 = scmp.eq.s32.totalorder %s42, 1
      %p191 = scmp.ne.s32.totalorder %s186, %s188
      %p192 = scmp.eq.s32.totalorder %s42, 0
      %p193 = por %p191, %p192
      %p194 = scmp.ne.s32.totalorder %s186, %s188
      %p195 = scmp.eq.s32.totalorder %s47, 1
      %p196 = por %p194, %p195
      %p197 = scmp.ne.s32.totalorder %s188, %s189
      %p198 = scmp.eq.s32.totalorder %s47, 0
      %p199 = por %p197, %p198
      %p200 = scmp.ne.s32.totalorder %s188, %s189
      %p201 = scmp.eq.s32.totalorder %s48, 1
      %p202 = por %p200, %p201
      %p204 = scmp.ne.s32.totalorder %s189, %s203
      %p205 = scmp.eq.s32.totalorder %s48, 0
      %p206 = por %p204, %p205
      %s208 = sadd.s32 %s207, 1
      %p211 = scmp.eq.s32.totalorder %s42, 1
      %p212 = scmp.ne.s32.totalorder %s207, %s209
      %p213 = scmp.eq.s32.totalorder %s42, 0
      %p214 = por %p212, %p213
      %p215 = scmp.ne.s32.totalorder %s207, %s209
      %p216 = scmp.eq.s32.totalorder %s47, 1
      %p217 = por %p215, %p216
      %p218 = scmp.ne.s32.totalorder %s209, %s210
      %p219 = scmp.eq.s32.totalorder %s47, 0
      %p220 = por %p218, %p219
      %p221 = scmp.ne.s32.totalorder %s209, %s210
      %p222 = scmp.eq.s32.totalorder %s48, 1
      %p223 = por %p221, %p222
      %p225 = scmp.ne.s32.totalorder %s210, %s224
      %p226 = scmp.eq.s32.totalorder %s48, 0
      %p227 = por %p225, %p226
      %s229 = sadd.s32 %s228, 1
      %p232 = scmp.eq.s32.totalorder %s42, 1
      %p233 = scmp.ne.s32.totalorder %s228, %s230
      %p234 = scmp.eq.s32.totalorder %s42, 0
      %p235 = por %p233, %p234
      %p236 = scmp.ne.s32.totalorder %s228, %s230
      %p237 = scmp.eq.s32.totalorder %s47, 1
      %p238 = por %p236, %p237
      %p239 = scmp.ne.s32.totalorder %s230, %s231
      %p240 = scmp.eq.s32.totalorder %s47, 0
      %p241 = por %p239, %p240
      %p242 = scmp.ne.s32.totalorder %s230, %s231
      %p243 = scmp.eq.s32.totalorder %s48, 1
      %p244 = por %p242, %p243
      %p246 = scmp.ne.s32.totalorder %s231, %s245
      %p247 = scmp.eq.s32.totalorder %s48, 0
      %p248 = por %p246, %p247
      %s250 = sadd.s32 %s249, 1
      %p253 = scmp.eq.s32.totalorder %s42, 1
      %p254 = scmp.ne.s32.totalorder %s249, %s251
      %p255 = scmp.eq.s32.totalorder %s42, 0
      %p256 = por %p254, %p255
      %p257 = scmp.ne.s32.totalorder %s249, %s251
      %p258 = scmp.eq.s32.totalorder %s47, 1
      %p259 = por %p257, %p258
      %p260 = scmp.ne.s32.totalorder %s251, %s252
      %p261 = scmp.eq.s32.totalorder %s47, 0
      %p262 = por %p260, %p261
      %p263 = scmp.ne.s32.totalorder %s251, %s252
      %p264 = scmp.eq.s32.totalorder %s48, 1
      %p265 = por %p263, %p264
      %p267 = scmp.ne.s32.totalorder %s252, %s266
      %p268 = scmp.eq.s32.totalorder %s48, 0
      %p269 = por %p267, %p268
      %s271 = sadd.s32 %s270, 1
      %p274 = scmp.eq.s32.totalorder %s42, 1
      %p275 = scmp.ne.s32.totalorder %s270, %s272
      %p276 = scmp.eq.s32.totalorder %s42, 0
      %p277 = por %p275, %p276
      %p278 = scmp.ne.s32.totalorder %s270, %s272
      %p279 = scmp.eq.s32.totalorder %s47, 1
      %p280 = por %p278, %p279
      %p281 = scmp.ne.s32.totalorder %s272, %s273
      %p282 = scmp.eq.s32.totalorder %s47, 0
      %p283 = por %p281, %p282
      %p284 = scmp.ne.s32.totalorder %s272, %s273
      %p285 = scmp.eq.s32.totalorder %s48, 1
      %p286 = por %p284, %p285
      %p288 = scmp.ne.s32.totalorder %s273, %s287
      %p289 = scmp.eq.s32.totalorder %s48, 0
      %p290 = por %p288, %p289
      %s292 = sadd.s32 %s291, 1
      %p295 = scmp.eq.s32.totalorder %s42, 1
      %p296 = scmp.ne.s32.totalorder %s291, %s293
      %p297 = scmp.eq.s32.totalorder %s42, 0
      %p298 = por %p296, %p297
      %p299 = scmp.ne.s32.totalorder %s291, %s293
      %p300 = scmp.eq.s32.totalorder %s47, 1
      %p301 = por %p299, %p300
      %p302 = scmp.ne.s32.totalorder %s293, %s294
      %p303 = scmp.eq.s32.totalorder %s47, 0
      %p304 = por %p302, %p303
      %p305 = scmp.ne.s32.totalorder %s293, %s294
      %p306 = scmp.eq.s32.totalorder %s48, 1
      %p307 = por %p305, %p306
      %p309 = scmp.ne.s32.totalorder %s294, %s308
      %p310 = scmp.eq.s32.totalorder %s48, 0
      %p311 = por %p309, %p310
      %s313 = sadd.s32 %s312, 1
      %p316 = scmp.eq.s32.totalorder %s42, 1
      %p317 = scmp.ne.s32.totalorder %s312, %s314
      %p318 = scmp.eq.s32.totalorder %s42, 0
      %p319 = por %p317, %p318
      %p320 = scmp.ne.s32.totalorder %s312, %s314
      %p321 = scmp.eq.s32.totalorder %s47, 1
      %p322 = por %p320, %p321
      %p323 = scmp.ne.s32.totalorder %s314, %s315
      %p324 = scmp.eq.s32.totalorder %s47, 0
      %p325 = por %p323, %p324
      %p326 = scmp.ne.s32.totalorder %s314, %s315
      %p327 = scmp.eq.s32.totalorder %s48, 1
      %p328 = por %p326, %p327
      %p330 = scmp.ne.s32.totalorder %s315, %s329
      %p331 = scmp.eq.s32.totalorder %s48, 0
      %p332 = por %p330, %p331
      %s334 = sadd.s32 %s333, 1
      %p337 = scmp.eq.s32.totalorder %s42, 1
      %p338 = scmp.ne.s32.totalorder %s333, %s335
      %p339 = scmp.eq.s32.totalorder %s42, 0
      %p340 = por %p338, %p339
      %p341 = scmp.ne.s32.totalorder %s333, %s335
      %p342 = scmp.eq.s32.totalorder %s47, 1
      %p343 = por %p341, %p342
      %p344 = scmp.ne.s32.totalorder %s335, %s336
      %p345 = scmp.eq.s32.totalorder %s47, 0
      %p346 = por %p344, %p345
      %p347 = scmp.ne.s32.totalorder %s335, %s336
      %p348 = scmp.eq.s32.totalorder %s48, 1
      %p349 = por %p347, %p348
      %p351 = scmp.ne.s32.totalorder %s336, %s350
      %p352 = scmp.eq.s32.totalorder %s48, 0
      %p353 = por %p351, %p352
      %s355 = sadd.s32 %s354, 1
      %p358 = scmp.eq.s32.totalorder %s42, 1
      %p359 = scmp.ne.s32.totalorder %s354, %s356
      %p360 = scmp.eq.s32.totalorder %s42, 0
      %p361 = por %p359, %p360
      %p362 = scmp.ne.s32.totalorder %s354, %s356
      %p363 = scmp.eq.s32.totalorder %s47, 1
      %p364 = por %p362, %p363
      %p365 = scmp.ne.s32.totalorder %s356, %s357
      %p366 = scmp.eq.s32.totalorder %s47, 0
      %p367 = por %p365, %p366
      %p368 = scmp.ne.s32.totalorder %s356, %s357
      %p369 = scmp.eq.s32.totalorder %s48, 1
      %p370 = por %p368, %p369
      %p372 = scmp.ne.s32.totalorder %s357, %s371
      %p373 = scmp.eq.s32.totalorder %s48, 0
      %p374 = por %p372, %p373
      %s376 = sadd.s32 %s375, 1
      %p379 = scmp.eq.s32.totalorder %s42, 1
      %p380 = scmp.ne.s32.totalorder %s375, %s377
      %p381 = scmp.eq.s32.totalorder %s42, 0
      %p382 = por %p380, %p381
      %p383 = scmp.ne.s32.totalorder %s375, %s377
      %p384 = scmp.eq.s32.totalorder %s47, 1
      %p385 = por %p383, %p384
      %p386 = scmp.ne.s32.totalorder %s377, %s378
      %p387 = scmp.eq.s32.totalorder %s47, 0
      %p388 = por %p386, %p387
      %p389 = scmp.ne.s32.totalorder %s377, %s378
      %p390 = scmp.eq.s32.totalorder %s48, 1
      %p391 = por %p389, %p390
      %p393 = scmp.ne.s32.totalorder %s378, %s392
      %p394 = scmp.eq.s32.totalorder %s48, 0
      %p395 = por %p393, %p394
      %s397 = sadd.s32 %s396, 1
      %p400 = scmp.eq.s32.totalorder %s42, 1
      %p401 = scmp.ne.s32.totalorder %s396, %s398
      %p402 = scmp.eq.s32.totalorder %s42, 0
      %p403 = por %p401, %p402
      %p404 = scmp.ne.s32.totalorder %s396, %s398
      %p405 = scmp.eq.s32.totalorder %s47, 1
      %p406 = por %p404, %p405
      %p407 = scmp.ne.s32.totalorder %s398, %s399
      %p408 = scmp.eq.s32.totalorder %s47, 0
      %p409 = por %p407, %p408
      %p410 = scmp.ne.s32.totalorder %s398, %s399
      %p411 = scmp.eq.s32.totalorder %s48, 1
      %p412 = por %p410, %p411
      %p414 = scmp.ne.s32.totalorder %s399, %s413
      %p415 = scmp.eq.s32.totalorder %s48, 0
      %p416 = por %p414, %p415
      %s418 = sadd.s32 %s417, 1
      %p421 = scmp.eq.s32.totalorder %s42, 1
      %p422 = scmp.ne.s32.totalorder %s417, %s419
      %p423 = scmp.eq.s32.totalorder %s42, 0
      %p424 = por %p422, %p423
      %p425 = scmp.ne.s32.totalorder %s417, %s419
      %p426 = scmp.eq.s32.totalorder %s47, 1
      %p427 = por %p425, %p426
      %p428 = scmp.ne.s32.totalorder %s419, %s420
      %p429 = scmp.eq.s32.totalorder %s47, 0
      %p430 = por %p428, %p429
      %p431 = scmp.ne.s32.totalorder %s419, %s420
      %p432 = scmp.eq.s32.totalorder %s48, 1
      %p433 = por %p431, %p432
      %p435 = scmp.ne.s32.totalorder %s420, %s434
      %p436 = scmp.eq.s32.totalorder %s48, 0
      %p437 = por %p435, %p436
      %s439 = sadd.s32 %s438, 1
      %p442 = scmp.eq.s32.totalorder %s42, 1
      %p443 = scmp.ne.s32.totalorder %s438, %s440
      %p444 = scmp.eq.s32.totalorder %s42, 0
      %p445 = por %p443, %p444
      %p446 = scmp.ne.s32.totalorder %s438, %s440
      %p447 = scmp.eq.s32.totalorder %s47, 1
      %p448 = por %p446, %p447
      %p449 = scmp.ne.s32.totalorder %s440, %s441
      %p450 = scmp.eq.s32.totalorder %s47, 0
      %p451 = por %p449, %p450
      %p452 = scmp.ne.s32.totalorder %s440, %s441
      %p453 = scmp.eq.s32.totalorder %s48, 1
      %p454 = por %p452, %p453
      %p456 = scmp.ne.s32.totalorder %s441, %s455
      %p457 = scmp.eq.s32.totalorder %s48, 0
      %p458 = por %p456, %p457
      %s460 = sadd.s32 %s459, 1
      %p463 = scmp.eq.s32.totalorder %s42, 1
      %p464 = scmp.ne.s32.totalorder %s459, %s461
      %p465 = scmp.eq.s32.totalorder %s42, 0
      %p466 = por %p464, %p465
      %p467 = scmp.ne.s32.totalorder %s459, %s461
      %p468 = scmp.eq.s32.totalorder %s47, 1
      %p469 = por %p467, %p468
      %p470 = scmp.ne.s32.totalorder %s461, %s462
      %p471 = scmp.eq.s32.totalorder %s47, 0
      %p472 = por %p470, %p471
      %p473 = scmp.ne.s32.totalorder %s461, %s462
      %p474 = scmp.eq.s32.totalorder %s48, 1
      %p475 = por %p473, %p474
      %p477 = scmp.ne.s32.totalorder %s462, %s476
      %p478 = scmp.eq.s32.totalorder %s48, 0
      %p479 = por %p477, %p478
      %s480 = ssub.s32 %s49, %s61
      %s481 = ssub.s32 %s50, %s57
      %s482 = sor.u32 %s480, %s481
      %p483 = scmp.eq.s32.totalorder %s482, 0
      %s485 = sadd.s32 %s484, 1
      %s486 = scalar_select %p483, %s484, %s485
      %p489 = pneg %p483
      %p490 = scmp.eq.s32.totalorder %s42, 1
      %p491 = por %p489, %p490
      %p492 = scmp.ne.s32.totalorder %s484, %s487
      %p493 = scmp.eq.s32.totalorder %s42, 0
      %p494 = por %p492, %p493
      %p495 = scmp.ne.s32.totalorder %s484, %s487
      %p496 = scmp.eq.s32.totalorder %s47, 1
      %p497 = por %p495, %p496
      %p498 = scmp.ne.s32.totalorder %s487, %s488
      %p499 = scmp.eq.s32.totalorder %s47, 0
      %p500 = por %p498, %p499
      %p501 = scmp.ne.s32.totalorder %s487, %s488
      %p502 = scmp.eq.s32.totalorder %s48, 1
      %p503 = por %p501, %p502
      %p505 = scmp.ne.s32.totalorder %s488, %s504
      %p506 = scmp.eq.s32.totalorder %s48, 0
      %p507 = por %p505, %p506
      %p508 = scmp.le.s32.totalorder 1, %s42
      %p509 = scmp.lt.s32.totalorder %s42, 3
      %p510 = pnand %p508, %p509
      %p511 = pneg %p510
      // Predicated region
      $region9: #{tpu_custom_call.1} parent=5 // pred_check
        _
      $region10: #{tpu_custom_call.1} parent=5 // pred_check_branch
        %513 = sbr.rel (%p510) target = $region12
      $region11: #{tpu_custom_call.1} parent=5 // pred_region
        %s514 = ssub.s32 %s42, 1
        // Predicated region
        $region13: #{tpu_custom_call.1} parent=11 // pred_check
          %p515 = pneg %p157
        $region14: #{tpu_custom_call.1} parent=11 // pred_check_branch
          %517 = sbr.rel (%p515) target = $region16
        $region15: #{tpu_custom_call.1} parent=11 // pred_region
          %s519 = ssub.s32 256, 256
          %520 = vsyncadd [#allocation9], %s519
          %s521 = sshll.u32 [#allocation8], 4
          %s522 = int_to_ptr.vmem [resolvable:$true] %s521
          %527 = dma.hbm_to_vmem [thread:$0]  %s3, 256, %s522, [#allocation9], 64, 64, 4
        $region16: #{tpu_custom_call.1} parent=11 // pred_fallthru
          _
        // Predicated region
        $region17: #{tpu_custom_call.1} parent=11 // pred_check
          %p528 = pneg %p178
        $region18: #{tpu_custom_call.1} parent=11 // pred_check_branch
          %530 = sbr.rel (%p528) target = $region20
        $region19: #{tpu_custom_call.1} parent=11 // pred_region
          %s532 = ssub.s32 16, 16
          %533 = vsyncadd [#allocation9], %s532
          %s535 = sshll.u32 [#allocation10], 4
          %s536 = int_to_ptr.vmem [resolvable:$true] %s535
          %538 = dma.hbm_to_vmem [thread:$0]  %s4, 16, %s536, [#allocation9]
        $region20: #{tpu_custom_call.1} parent=11 // pred_fallthru
          _
        // Predicated region
        $region21: #{tpu_custom_call.1} parent=11 // pred_check
          %p539 = pneg %p199
        $region22: #{tpu_custom_call.1} parent=11 // pred_check_branch
          %541 = sbr.rel (%p539) target = $region24
        $region23: #{tpu_custom_call.1} parent=11 // pred_region
          %s543 = ssub.s32 256, 256
          %544 = vsyncadd [#allocation12], %s543
          %s545 = sshll.u32 [#allocation11], 4
          %s546 = int_to_ptr.vmem [resolvable:$true] %s545
          %551 = dma.hbm_to_vmem [thread:$0]  %s5, 256, %s546, [#allocation12], 64, 64, 4
        $region24: #{tpu_custom_call.1} parent=11 // pred_fallthru
          _
        // Predicated region
        $region25: #{tpu_custom_call.1} parent=11 // pred_check
          %p552 = pneg %p220
        $region26: #{tpu_custom_call.1} parent=11 // pred_check_branch
          %554 = sbr.rel (%p552) target = $region28
        $region27: #{tpu_custom_call.1} parent=11 // pred_region
          %s556 = ssub.s32 16, 16
          %557 = vsyncadd [#allocation12], %s556
          %s559 = sshll.u32 [#allocation13], 4
          %s560 = int_to_ptr.vmem [resolvable:$true] %s559
          %562 = dma.hbm_to_vmem [thread:$0]  %s6, 16, %s560, [#allocation12]
        $region28: #{tpu_custom_call.1} parent=11 // pred_fallthru
          _
        // Predicated region
        $region29: #{tpu_custom_call.1} parent=11 // pred_check
          %p563 = pneg %p241
        $region30: #{tpu_custom_call.1} parent=11 // pred_check_branch
          %565 = sbr.rel (%p563) target = $region32
        $region31: #{tpu_custom_call.1} parent=11 // pred_region
          %s567 = ssub.s32 256, 256
          %568 = vsyncadd [#allocation15], %s567
          %s569 = sshll.u32 [#allocation14], 4
          %s570 = int_to_ptr.vmem [resolvable:$true] %s569
          %575 = dma.hbm_to_vmem [thread:$0]  %s7, 256, %s570, [#allocation15], 64, 64, 4
        $region32: #{tpu_custom_call.1} parent=11 // pred_fallthru
          _
        // Predicated region
        $region33: #{tpu_custom_call.1} parent=11 // pred_check
          %p576 = pneg %p262
        $region34: #{tpu_custom_call.1} parent=11 // pred_check_branch
          %578 = sbr.rel (%p576) target = $region36
        $region35: #{tpu_custom_call.1} parent=11 // pred_region
          %s580 = ssub.s32 16, 16
          %581 = vsyncadd [#allocation15], %s580
          %s583 = sshll.u32 [#allocation16], 4
          %s584 = int_to_ptr.vmem [resolvable:$true] %s583
          %586 = dma.hbm_to_vmem [thread:$0]  %s8, 16, %s584, [#allocation15]
        $region36: #{tpu_custom_call.1} parent=11 // pred_fallthru
          _
        // Predicated region
        $region37: #{tpu_custom_call.1} parent=11 // pred_check
          %p587 = pneg %p283
        $region38: #{tpu_custom_call.1} parent=11 // pred_check_branch
          %589 = sbr.rel (%p587) target = $region40
        $region39: #{tpu_custom_call.1} parent=11 // pred_region
          %s591 = ssub.s32 256, 256
          %592 = vsyncadd [#allocation18], %s591
          %s593 = sshll.u32 [#allocation17], 4
          %s594 = int_to_ptr.vmem [resolvable:$true] %s593
          %599 = dma.hbm_to_vmem [thread:$0]  %s9, 256, %s594, [#allocation18], 64, 64, 4
        $region40: #{tpu_custom_call.1} parent=11 // pred_fallthru
          _
        // Predicated region
        $region41: #{tpu_custom_call.1} parent=11 // pred_check
          %p600 = pneg %p304
        $region42: #{tpu_custom_call.1} parent=11 // pred_check_branch
          %602 = sbr.rel (%p600) target = $region44
        $region43: #{tpu_custom_call.1} parent=11 // pred_region
          %s604 = ssub.s32 16, 16
          %605 = vsyncadd [#allocation18], %s604
          %s607 = sshll.u32 [#allocation19], 4
          %s608 = int_to_ptr.vmem [resolvable:$true] %s607
          %610 = dma.hbm_to_vmem [thread:$0]  %s10, 16, %s608, [#allocation18]
        $region44: #{tpu_custom_call.1} parent=11 // pred_fallthru
          _
        // Predicated region
        $region45: #{tpu_custom_call.1} parent=11 // pred_check
          %p611 = pneg %p325
        $region46: #{tpu_custom_call.1} parent=11 // pred_check_branch
          %613 = sbr.rel (%p611) target = $region48
        $region47: #{tpu_custom_call.1} parent=11 // pred_region
          %s615 = ssub.s32 16, 16
          %616 = vsyncadd [#allocation21], %s615
          %s618 = sshll.u32 [#allocation20], 4
          %s619 = int_to_ptr.vmem [resolvable:$true] %s618
          %621 = dma.hbm_to_vmem [thread:$0]  %s11, 16, %s619, [#allocation21]
        $region48: #{tpu_custom_call.1} parent=11 // pred_fallthru
          _
        // Predicated region
        $region49: #{tpu_custom_call.1} parent=11 // pred_check
          %p622 = pneg %p346
        $region50: #{tpu_custom_call.1} parent=11 // pred_check_branch
          %624 = sbr.rel (%p622) target = $region52
        $region51: #{tpu_custom_call.1} parent=11 // pred_region
          %s626 = ssub.s32 16, 16
          %627 = vsyncadd [#allocation21], %s626
          %s629 = sshll.u32 [#allocation22], 4
          %s630 = int_to_ptr.vmem [resolvable:$true] %s629
          %632 = dma.hbm_to_vmem [thread:$0]  %s12, 16, %s630, [#allocation21]
        $region52: #{tpu_custom_call.1} parent=11 // pred_fallthru
          _
        // Predicated region
        $region53: #{tpu_custom_call.1} parent=11 // pred_check
          %p633 = pneg %p367
        $region54: #{tpu_custom_call.1} parent=11 // pred_check_branch
          %635 = sbr.rel (%p633) target = $region56
        $region55: #{tpu_custom_call.1} parent=11 // pred_region
          %s637 = ssub.s32 256, 256
          %638 = vsyncadd [#allocation24], %s637
          %s639 = sshll.u32 [#allocation23], 4
          %s640 = int_to_ptr.vmem [resolvable:$true] %s639
          %645 = dma.hbm_to_vmem [thread:$0]  %s13, 256, %s640, [#allocation24], 64, 64, 4
        $region56: #{tpu_custom_call.1} parent=11 // pred_fallthru
          _
        // Predicated region
        $region57: #{tpu_custom_call.1} parent=11 // pred_check
          %p646 = pneg %p388
        $region58: #{tpu_custom_call.1} parent=11 // pred_check_branch
          %648 = sbr.rel (%p646) target = $region60
        $region59: #{tpu_custom_call.1} parent=11 // pred_region
          %s650 = ssub.s32 16, 16
          %651 = vsyncadd [#allocation24], %s650
          %s653 = sshll.u32 [#allocation25], 4
          %s654 = int_to_ptr.vmem [resolvable:$true] %s653
          %656 = dma.hbm_to_vmem [thread:$0]  %s14, 16, %s654, [#allocation24]
        $region60: #{tpu_custom_call.1} parent=11 // pred_fallthru
          _
        // Predicated region
        $region61: #{tpu_custom_call.1} parent=11 // pred_check
          %p657 = pneg %p409
        $region62: #{tpu_custom_call.1} parent=11 // pred_check_branch
          %659 = sbr.rel (%p657) target = $region64
        $region63: #{tpu_custom_call.1} parent=11 // pred_region
          %s661 = ssub.s32 512, 512
          %662 = vsyncadd [#allocation27], %s661
          %s663 = sshll.u32 [#allocation26], 4
          %s664 = int_to_ptr.vmem [resolvable:$true] %s663
          %669 = dma.hbm_to_vmem [thread:$0]  %s15, 512, %s664, [#allocation27], 64, 64, 4
        $region64: #{tpu_custom_call.1} parent=11 // pred_fallthru
          _
        // Predicated region
        $region65: #{tpu_custom_call.1} parent=11 // pred_check
          %p670 = pneg %p430
        $region66: #{tpu_custom_call.1} parent=11 // pred_check_branch
          %672 = sbr.rel (%p670) target = $region68
        $region67: #{tpu_custom_call.1} parent=11 // pred_region
          %s674 = ssub.s32 16, 16
          %675 = vsyncadd [#allocation27], %s674
          %s677 = sshll.u32 [#allocation28], 4
          %s678 = int_to_ptr.vmem [resolvable:$true] %s677
          %680 = dma.hbm_to_vmem [thread:$0]  %s16, 16, %s678, [#allocation27]
        $region68: #{tpu_custom_call.1} parent=11 // pred_fallthru
          _
        // Predicated region
        $region69: #{tpu_custom_call.1} parent=11 // pred_check
          %p681 = pneg %p451
        $region70: #{tpu_custom_call.1} parent=11 // pred_check_branch
          %683 = sbr.rel (%p681) target = $region72
        $region71: #{tpu_custom_call.1} parent=11 // pred_region
          %s685 = ssub.s32 16, 16
          %686 = vsyncadd [#allocation30], %s685
          %s688 = sshll.u32 [#allocation29], 4
          %s689 = int_to_ptr.vmem [resolvable:$true] %s688
          %691 = dma.hbm_to_vmem [thread:$0]  %s17, 16, %s689, [#allocation30]
        $region72: #{tpu_custom_call.1} parent=11 // pred_fallthru
          _
        // Predicated region
        $region73: #{tpu_custom_call.1} parent=11 // pred_check
          %p692 = pneg %p472
        $region74: #{tpu_custom_call.1} parent=11 // pred_check_branch
          %694 = sbr.rel (%p692) target = $region76
        $region75: #{tpu_custom_call.1} parent=11 // pred_region
          %s696 = ssub.s32 16, 16
          %697 = vsyncadd [#allocation30], %s696
          %s699 = sshll.u32 [#allocation31], 4
          %s700 = int_to_ptr.vmem [resolvable:$true] %s699
          %702 = dma.hbm_to_vmem [thread:$0]  %s18, 16, %s700, [#allocation30]
        $region76: #{tpu_custom_call.1} parent=11 // pred_fallthru
          _
      $region12: #{tpu_custom_call.1} parent=5 // pred_fallthru
        _
      %p703 = scmp.lt.s32.totalorder %s42, 2
      // Predicated region
      $region77: #{tpu_custom_call.1} parent=5 // pred_check
        %p704 = pneg %p703
      $region78: #{tpu_custom_call.1} parent=5 // pred_check_branch
        %706 = sbr.rel (%p704) target = $region80
      $region79: #{tpu_custom_call.1} parent=5 // pred_region
        // Predicated region
        $region81: #{tpu_custom_call.1} parent=79 // pred_check
          %p707 = pneg %p76
        $region82: #{tpu_custom_call.1} parent=79 // pred_check_branch
          %709 = sbr.rel (%p707) target = $region84
        $region83: #{tpu_custom_call.1} parent=79 // pred_region
          %s710 = sand.u32 %s66, 1
          %s711 = scalar_lea.sflag [#allocation3], %s710
          %s712 = sand.u32 %s66, 1
          %s713 = smul.addr %s712, 8
          %s714 = scalar_lea.vmem [#allocation2], %s713
          %s716 = ssub.s32 128, 128
          %717 = vsyncadd %s711, %s716
          %s718 = sadd.s32 %s50, %s49
          %s719 = smul.addr %s718, 128
          %s720 = scalar_lea.hbm %s0, %s719
          %s722 = sshll.u32 %s714, 4
          %s723 = int_to_ptr.vmem [resolvable:$true] %s722
          %725 = dma.hbm_to_vmem [thread:$0]  %s720, 128, %s723, %s711
        $region84: #{tpu_custom_call.1} parent=79 // pred_fallthru
          _
        // Predicated region
        $region85: #{tpu_custom_call.1} parent=79 // pred_check
          %p726 = pneg %p102
        $region86: #{tpu_custom_call.1} parent=79 // pred_check_branch
          %728 = sbr.rel (%p726) target = $region88
        $region87: #{tpu_custom_call.1} parent=79 // pred_region
          %s729 = sand.u32 %s42, 1
          %s730 = scalar_lea.sflag [#allocation6], %s729
          %s731 = sand.u32 %s92, 1
          %s732 = smul.addr %s731, 8
          %s733 = scalar_lea.vmem [#allocation5], %s732
          %s735 = ssub.s32 128, 128
          %736 = vsyncadd %s730, %s735
          %s737 = smul.addr %s49, 128
          %s738 = scalar_lea.hbm %s1, %s737
          %s740 = sshll.u32 %s733, 4
          %s741 = int_to_ptr.vmem [resolvable:$true] %s740
          %743 = dma.hbm_to_vmem [thread:$0]  %s738, 128, %s741, %s730
        $region88: #{tpu_custom_call.1} parent=79 // pred_fallthru
          _
        // Predicated region
        $region89: #{tpu_custom_call.1} parent=79 // pred_check
          %p744 = pneg %p130
        $region90: #{tpu_custom_call.1} parent=79 // pred_check_branch
          %746 = sbr.rel (%p744) target = $region92
        $region91: #{tpu_custom_call.1} parent=79 // pred_region
          %s747 = sand.u32 %s42, 1
          %s748 = scalar_lea.sflag [#allocation6], %s747
          %s749 = sand.u32 %s120, 1
          %s750 = smul.addr %s749, 8
          %s751 = scalar_lea.vmem [#allocation7], %s750
          %s753 = ssub.s32 128, 128
          %754 = vsyncadd %s748, %s753
          %s755 = sadd.s32 %s50, %s49
          %s756 = smul.addr %s755, 128
          %s757 = scalar_lea.hbm %s2, %s756
          %s759 = sshll.u32 %s751, 4
          %s760 = int_to_ptr.vmem [resolvable:$true] %s759
          %762 = dma.hbm_to_vmem [thread:$0]  %s757, 128, %s760, %s748
        $region92: #{tpu_custom_call.1} parent=79 // pred_fallthru
          _
      $region80: #{tpu_custom_call.1} parent=5 // pred_fallthru
        _
      %p763 = scmp.le.s32.totalorder 1, %s42
      %p764 = scmp.lt.s32.totalorder %s42, 3
      %p765 = pnand %p763, %p764
      %p766 = pneg %p765
      // Predicated region
      $region93: #{tpu_custom_call.1} parent=5 // pred_check
        _
      $region94: #{tpu_custom_call.1} parent=5 // pred_check_branch
        %768 = sbr.rel (%p765) target = $region96
      $region95: #{tpu_custom_call.1} parent=5 // pred_region
        %s769 = ssub.s32 %s42, 1
        %s770 = sand.u32 %s69, 1
        %s771 = scalar_lea.sflag [#allocation3], %s770
        %s772 = sand.u32 %s69, 1
        %s773 = smul.addr %s772, 8
        %s774 = scalar_lea.vmem [#allocation2], %s773
        // Predicated region
        $region97: #{tpu_custom_call.1} parent=95 // pred_check
          %p775 = pneg %p82
        $region98: #{tpu_custom_call.1} parent=95 // pred_check_branch
          %777 = sbr.rel (%p775) target = $region100
        $region99: #{tpu_custom_call.1} parent=95 // pred_region
          %778 = dma.done %s771, 128
        $region100: #{tpu_custom_call.1} parent=95 // pred_fallthru
          _
        %s779 = sand.u32 %s47, 1
        %s780 = scalar_lea.sflag [#allocation6], %s779
        %s781 = sand.u32 %s95, 1
        %s782 = smul.addr %s781, 8
        %s783 = scalar_lea.vmem [#allocation5], %s782
        // Predicated region
        $region101: #{tpu_custom_call.1} parent=95 // pred_check
          %p784 = pneg %p108
        $region102: #{tpu_custom_call.1} parent=95 // pred_check_branch
          %786 = sbr.rel (%p784) target = $region104
        $region103: #{tpu_custom_call.1} parent=95 // pred_region
          %787 = dma.done %s780, 128
        $region104: #{tpu_custom_call.1} parent=95 // pred_fallthru
          _
        %s788 = sand.u32 %s47, 1
        %s789 = scalar_lea.sflag [#allocation6], %s788
        %s790 = sand.u32 %s123, 1
        %s791 = smul.addr %s790, 8
        %s792 = scalar_lea.vmem [#allocation7], %s791
        // Predicated region
        $region105: #{tpu_custom_call.1} parent=95 // pred_check
          %p793 = pneg %p136
        $region106: #{tpu_custom_call.1} parent=95 // pred_check_branch
          %795 = sbr.rel (%p793) target = $region108
        $region107: #{tpu_custom_call.1} parent=95 // pred_region
          %796 = dma.done %s789, 128
        $region108: #{tpu_custom_call.1} parent=95 // pred_fallthru
          _
        // Predicated region
        $region109: #{tpu_custom_call.1} parent=95 // pred_check
          %p797 = pneg %p157
        $region110: #{tpu_custom_call.1} parent=95 // pred_check_branch
          %799 = sbr.rel (%p797) target = $region112
        $region111: #{tpu_custom_call.1} parent=95 // pred_region
          %800 = dma.done [#allocation9], 256
        $region112: #{tpu_custom_call.1} parent=95 // pred_fallthru
          _
        // Predicated region
        $region113: #{tpu_custom_call.1} parent=95 // pred_check
          %p801 = pneg %p178
        $region114: #{tpu_custom_call.1} parent=95 // pred_check_branch
          %803 = sbr.rel (%p801) target = $region116
        $region115: #{tpu_custom_call.1} parent=95 // pred_region
          %804 = dma.done [#allocation9], 16
        $region116: #{tpu_custom_call.1} parent=95 // pred_fallthru
          _
        // Predicated region
        $region117: #{tpu_custom_call.1} parent=95 // pred_check
          %p805 = pneg %p199
        $region118: #{tpu_custom_call.1} parent=95 // pred_check_branch
          %807 = sbr.rel (%p805) target = $region120
        $region119: #{tpu_custom_call.1} parent=95 // pred_region
          %808 = dma.done [#allocation12], 256
        $region120: #{tpu_custom_call.1} parent=95 // pred_fallthru
          _
        // Predicated region
        $region121: #{tpu_custom_call.1} parent=95 // pred_check
          %p809 = pneg %p220
        $region122: #{tpu_custom_call.1} parent=95 // pred_check_branch
          %811 = sbr.rel (%p809) target = $region124
        $region123: #{tpu_custom_call.1} parent=95 // pred_region
          %812 = dma.done [#allocation12], 16
        $region124: #{tpu_custom_call.1} parent=95 // pred_fallthru
          _
        // Predicated region
        $region125: #{tpu_custom_call.1} parent=95 // pred_check
          %p813 = pneg %p241
        $region126: #{tpu_custom_call.1} parent=95 // pred_check_branch
          %815 = sbr.rel (%p813) target = $region128
        $region127: #{tpu_custom_call.1} parent=95 // pred_region
          %816 = dma.done [#allocation15], 256
        $region128: #{tpu_custom_call.1} parent=95 // pred_fallthru
          _
        // Predicated region
        $region129: #{tpu_custom_call.1} parent=95 // pred_check
          %p817 = pneg %p262
        $region130: #{tpu_custom_call.1} parent=95 // pred_check_branch
          %819 = sbr.rel (%p817) target = $region132
        $region131: #{tpu_custom_call.1} parent=95 // pred_region
          %820 = dma.done [#allocation15], 16
        $region132: #{tpu_custom_call.1} parent=95 // pred_fallthru
          _
        // Predicated region
        $region133: #{tpu_custom_call.1} parent=95 // pred_check
          %p821 = pneg %p283
        $region134: #{tpu_custom_call.1} parent=95 // pred_check_branch
          %823 = sbr.rel (%p821) target = $region136
        $region135: #{tpu_custom_call.1} parent=95 // pred_region
          %824 = dma.done [#allocation18], 256
        $region136: #{tpu_custom_call.1} parent=95 // pred_fallthru
          _
        // Predicated region
        $region137: #{tpu_custom_call.1} parent=95 // pred_check
          %p825 = pneg %p304
        $region138: #{tpu_custom_call.1} parent=95 // pred_check_branch
          %827 = sbr.rel (%p825) target = $region140
        $region139: #{tpu_custom_call.1} parent=95 // pred_region
          %828 = dma.done [#allocation18], 16
        $region140: #{tpu_custom_call.1} parent=95 // pred_fallthru
          _
        // Predicated region
        $region141: #{tpu_custom_call.1} parent=95 // pred_check
          %p829 = pneg %p325
        $region142: #{tpu_custom_call.1} parent=95 // pred_check_branch
          %831 = sbr.rel (%p829) target = $region144
        $region143: #{tpu_custom_call.1} parent=95 // pred_region
          %832 = dma.done [#allocation21], 16
        $region144: #{tpu_custom_call.1} parent=95 // pred_fallthru
          _
        // Predicated region
        $region145: #{tpu_custom_call.1} parent=95 // pred_check
          %p833 = pneg %p346
        $region146: #{tpu_custom_call.1} parent=95 // pred_check_branch
          %835 = sbr.rel (%p833) target = $region148
        $region147: #{tpu_custom_call.1} parent=95 // pred_region
          %836 = dma.done [#allocation21], 16
        $region148: #{tpu_custom_call.1} parent=95 // pred_fallthru
          _
        // Predicated region
        $region149: #{tpu_custom_call.1} parent=95 // pred_check
          %p837 = pneg %p367
        $region150: #{tpu_custom_call.1} parent=95 // pred_check_branch
          %839 = sbr.rel (%p837) target = $region152
        $region151: #{tpu_custom_call.1} parent=95 // pred_region
          %840 = dma.done [#allocation24], 256
        $region152: #{tpu_custom_call.1} parent=95 // pred_fallthru
          _
        // Predicated region
        $region153: #{tpu_custom_call.1} parent=95 // pred_check
          %p841 = pneg %p388
        $region154: #{tpu_custom_call.1} parent=95 // pred_check_branch
          %843 = sbr.rel (%p841) target = $region156
        $region155: #{tpu_custom_call.1} parent=95 // pred_region
          %844 = dma.done [#allocation24], 16
        $region156: #{tpu_custom_call.1} parent=95 // pred_fallthru
          _
        // Predicated region
        $region157: #{tpu_custom_call.1} parent=95 // pred_check
          %p845 = pneg %p409
        $region158: #{tpu_custom_call.1} parent=95 // pred_check_branch
          %847 = sbr.rel (%p845) target = $region160
        $region159: #{tpu_custom_call.1} parent=95 // pred_region
          %848 = dma.done [#allocation27], 512
        $region160: #{tpu_custom_call.1} parent=95 // pred_fallthru
          _
        // Predicated region
        $region161: #{tpu_custom_call.1} parent=95 // pred_check
          %p849 = pneg %p430
        $region162: #{tpu_custom_call.1} parent=95 // pred_check_branch
          %851 = sbr.rel (%p849) target = $region164
        $region163: #{tpu_custom_call.1} parent=95 // pred_region
          %852 = dma.done [#allocation27], 16
        $region164: #{tpu_custom_call.1} parent=95 // pred_fallthru
          _
        // Predicated region
        $region165: #{tpu_custom_call.1} parent=95 // pred_check
          %p853 = pneg %p451
        $region166: #{tpu_custom_call.1} parent=95 // pred_check_branch
          %855 = sbr.rel (%p853) target = $region168
        $region167: #{tpu_custom_call.1} parent=95 // pred_region
          %856 = dma.done [#allocation30], 16
        $region168: #{tpu_custom_call.1} parent=95 // pred_fallthru
          _
        // Predicated region
        $region169: #{tpu_custom_call.1} parent=95 // pred_check
          %p857 = pneg %p472
        $region170: #{tpu_custom_call.1} parent=95 // pred_check_branch
          %859 = sbr.rel (%p857) target = $region172
        $region171: #{tpu_custom_call.1} parent=95 // pred_region
          %860 = dma.done [#allocation30], 16
        $region172: #{tpu_custom_call.1} parent=95 // pred_fallthru
          _
        %s861 = sand.u32 %s69, 1
        %s862 = scalar_lea.sflag [#allocation3], %s861
        %s863 = sand.u32 %s69, 1
        %s864 = smul.addr %s863, 8
        %s865 = scalar_lea.vmem [#allocation2], %s864
        %p866 = pneg %p82
        %p867 = pneg %p79
        %s868 = sand.u32 %s47, 1
        %s869 = scalar_lea.sflag [#allocation6], %s868
        %s870 = sand.u32 %s95, 1
        %s871 = smul.addr %s870, 8
        %s872 = scalar_lea.vmem [#allocation5], %s871
        %p873 = pneg %p108
        %p874 = pneg %p105
        %s875 = sand.u32 %s47, 1
        %s876 = scalar_lea.sflag [#allocation6], %s875
        %s877 = sand.u32 %s123, 1
        %s878 = smul.addr %s877, 8
        %s879 = scalar_lea.vmem [#allocation7], %s878
        %p880 = pneg %p136
        %p881 = pneg %p133
        %p882 = pneg %p157
        %p883 = pneg %p154
        %p884 = pneg %p178
        %p885 = pneg %p175
        %p886 = pneg %p199
        %p887 = pneg %p196
        %p888 = pneg %p220
        %p889 = pneg %p217
        %p890 = pneg %p241
        %p891 = pneg %p238
        %p892 = pneg %p262
        %p893 = pneg %p259
        %p894 = pneg %p283
        %p895 = pneg %p280
        %p896 = pneg %p304
        %p897 = pneg %p301
        %p898 = pneg %p325
        %p899 = pneg %p322
        %p900 = pneg %p346
        %p901 = pneg %p343
        %p902 = pneg %p367
        %p903 = pneg %p364
        %p904 = pneg %p388
        %p905 = pneg %p385
        %p906 = pneg %p409
        %p907 = pneg %p406
        %p908 = pneg %p430
        %p909 = pneg %p427
        %p910 = pneg %p451
        %p911 = pneg %p448
        %p912 = pneg %p472
        %p913 = pneg %p469
        %p914 = pneg %p500
        %p915 = pneg %p497
        %s916 = sand.u32 %s487, 1
        %s917 = scalar_lea.sflag [#allocation4], %s916
        %s918 = sand.u32 %s487, 1
        %s919 = smul.addr %s918, 8
        %s920 = scalar_lea.vmem [#allocation32], %s919
        %v922 = vld [vmem:[%s774] sm:$0xff]
        %v923 = vld [vmem:[%s783] sm:$0xff]
        %v924 = vld [vmem:[%s792] sm:$0xff]
        %v925 = vpack.c.bf16 %v922, %v922
        %v926 = vpack.c.bf16 %v923, %v923
        %v927 = vld [vmem:[#allocation8] sm:$0xf]
        %v928 = vld [vmem:[#allocation8 + $0x4] sm:$0xf]
        %v929 = vld [vmem:[#allocation8 + $0x8] sm:$0xf]
        %v930 = vld [vmem:[#allocation8 + $0xc] sm:$0xf]
        %v931 = vld [vmem:[#allocation10] sm:$0x1]
        %v933 = vlaneseq
        %v934 = vshrl.u32 %v933, 7
        %v935 = vsub.s32 0, %v934
        %v936 = vrot.slane %v931, %v935
        %v942 = vunpack.c.l.b16 %v927
        %v943 = vunpack.c.l.b16 %v928
        %v944 = vunpack.c.l.b16 %v929
        %v945 = vunpack.c.l.b16 %v930
        %v946 = vpack.c.b16 %v943, %v942
        %v947 = vpack.c.b16 %v945, %v944
        %vm950 = vcmask 261120
        %v952 = vsel %vm950, %v925, 0
        %954 = vmatprep.subr.bf16.mxu0 0
        %955 = vmatpush1.bf16.msra.mxu0 %v946
        %956 = vmatprep.subr.bf16.mxu0 0
        %957 = vmatpush1.bf16.msra.mxu0 %v947
        %958 = vmatprep.subr.bf16.mxu0 0
        %959 = vmatpush1.bf16.msra.mxu0 0
        %960 = vmatprep.subr.bf16.mxu0 0
        %961 = vmatpush1.bf16.msra.mxu0 0
        %962 = vmatprep.subr.bf16.mxu0 0
        %963 = vmatpush1.bf16.msra.mxu0 0
        %964 = vmatprep.subr.bf16.mxu0 0
        %965 = vmatpush1.bf16.msra.mxu0 0
        %966 = vmatprep.subr.bf16.mxu0 0
        %967 = vmatpush1.bf16.msra.mxu0 0
        %968 = vmatprep.subr.bf16.mxu0 0
        %969 = vmatpush1.bf16.msra.mxu0 0
        %970 = vmatprep.subr.bf16.mxu0 0
        %971 = vmatpush1.bf16.msra.mxu0 0
        %972 = vmatprep.subr.bf16.mxu0 0
        %973 = vmatpush1.bf16.msra.mxu0 0
        %974 = vmatprep.subr.bf16.mxu0 0
        %975 = vmatpush1.bf16.msra.mxu0 0
        %976 = vmatprep.subr.bf16.mxu0 0
        %977 = vmatpush1.bf16.msra.mxu0 0
        %978 = vmatprep.subr.bf16.mxu0 0
        %979 = vmatpush1.bf16.msra.mxu0 0
        %980 = vmatprep.subr.bf16.mxu0 0
        %981 = vmatpush1.bf16.msra.mxu0 0
        %982 = vmatprep.subr.bf16.mxu0 0
        %983 = vmatpush1.bf16.msra.mxu0 0
        %984 = vmatprep.subr.bf16.mxu0 0
        %985 = vmatpush1.bf16.msra.mxu0 0
        %986 = vmatprep.mubr.bf16.mxu0 0
        %987 = vmatmul.mubr.bf16.gmra.mrb[0].mxu0 %v952
        %v988 = vpop.f32.mrb[0].mxu0
        %v989 = vadd.f32 %v936, %v988
        %v990 = vpop.f32.mrb[0].mxu0
        %v991 = vpop.f32.mrb[0].mxu0
        %v992 = vpop.f32.mrb[0].mxu0
        %993 = vdwg.mxu0
        %v994 = vld [vmem:[#allocation11] sm:$0xf]
        %v995 = vld [vmem:[#allocation11 + $0x4] sm:$0xf]
        %v996 = vld [vmem:[#allocation11 + $0x8] sm:$0xf]
        %v997 = vld [vmem:[#allocation11 + $0xc] sm:$0xf]
        %v998 = vld [vmem:[#allocation13] sm:$0x1]
        %v1000 = vlaneseq
        %v1001 = vshrl.u32 %v1000, 7
        %v1002 = vsub.s32 0, %v1001
        %v1003 = vrot.slane %v998, %v1002
        %v1009 = vunpack.c.l.b16 %v994
        %v1010 = vunpack.c.l.b16 %v995
        %v1011 = vunpack.c.l.b16 %v996
        %v1012 = vunpack.c.l.b16 %v997
        %v1013 = vpack.c.b16 %v1010, %v1009
        %v1014 = vpack.c.b16 %v1012, %v1011
        %v1018 = vsel %vm950, %v926, 0
        %1020 = vmatprep.subr.bf16.mxu0 0
        %1021 = vmatpush1.bf16.msra.mxu0 %v1013
        %1022 = vmatprep.subr.bf16.mxu0 0
        %1023 = vmatpush1.bf16.msra.mxu0 %v1014
        %1024 = vmatprep.subr.bf16.mxu0 0
        %1025 = vmatpush1.bf16.msra.mxu0 0
        %1026 = vmatprep.subr.bf16.mxu0 0
        %1027 = vmatpush1.bf16.msra.mxu0 0
        %1028 = vmatprep.subr.bf16.mxu0 0
        %1029 = vmatpush1.bf16.msra.mxu0 0
        %1030 = vmatprep.subr.bf16.mxu0 0
        %1031 = vmatpush1.bf16.msra.mxu0 0
        %1032 = vmatprep.subr.bf16.mxu0 0
        %1033 = vmatpush1.bf16.msra.mxu0 0
        %1034 = vmatprep.subr.bf16.mxu0 0
        %1035 = vmatpush1.bf16.msra.mxu0 0
        %1036 = vmatprep.subr.bf16.mxu0 0
        %1037 = vmatpush1.bf16.msra.mxu0 0
        %1038 = vmatprep.subr.bf16.mxu0 0
        %1039 = vmatpush1.bf16.msra.mxu0 0
        %1040 = vmatprep.subr.bf16.mxu0 0
        %1041 = vmatpush1.bf16.msra.mxu0 0
        %1042 = vmatprep.subr.bf16.mxu0 0
        %1043 = vmatpush1.bf16.msra.mxu0 0
        %1044 = vmatprep.subr.bf16.mxu0 0
        %1045 = vmatpush1.bf16.msra.mxu0 0
        %1046 = vmatprep.subr.bf16.mxu0 0
        %1047 = vmatpush1.bf16.msra.mxu0 0
        %1048 = vmatprep.subr.bf16.mxu0 0
        %1049 = vmatpush1.bf16.msra.mxu0 0
        %1050 = vmatprep.subr.bf16.mxu0 0
        %1051 = vmatpush1.bf16.msra.mxu0 0
        %1052 = vmatprep.mubr.bf16.mxu0 0
        %1053 = vmatmul.mubr.bf16.gmra.mrb[0].mxu0 %v1018
        %v1054 = vpop.f32.mrb[0].mxu0
        %v1055 = vadd.f32 %v1003, %v1054
        %v1056 = vpop.f32.mrb[0].mxu0
        %v1057 = vpop.f32.mrb[0].mxu0
        %v1058 = vpop.f32.mrb[0].mxu0
        %1059 = vdwg.mxu0
        %v1060 = vld [vmem:[#allocation14] sm:$0xf]
        %v1061 = vld [vmem:[#allocation14 + $0x4] sm:$0xf]
        %v1062 = vld [vmem:[#allocation14 + $0x8] sm:$0xf]
        %v1063 = vld [vmem:[#allocation14 + $0xc] sm:$0xf]
        %v1064 = vld [vmem:[#allocation16] sm:$0x1]
        %v1066 = vlaneseq
        %v1067 = vshrl.u32 %v1066, 7
        %v1068 = vsub.s32 0, %v1067
        %v1069 = vrot.slane %v1064, %v1068
        %v1075 = vunpack.c.l.b16 %v1060
        %v1076 = vunpack.c.l.b16 %v1061
        %v1077 = vunpack.c.l.b16 %v1062
        %v1078 = vunpack.c.l.b16 %v1063
        %v1079 = vpack.c.b16 %v1076, %v1075
        %v1080 = vpack.c.b16 %v1078, %v1077
        %1083 = vmatprep.subr.bf16.mxu0 0
        %1084 = vmatpush1.bf16.msra.mxu0 %v1079
        %1085 = vmatprep.subr.bf16.mxu0 0
        %1086 = vmatpush1.bf16.msra.mxu0 %v1080
        %1087 = vmatprep.subr.bf16.mxu0 0
        %1088 = vmatpush1.bf16.msra.mxu0 0
        %1089 = vmatprep.subr.bf16.mxu0 0
        %1090 = vmatpush1.bf16.msra.mxu0 0
        %1091 = vmatprep.subr.bf16.mxu0 0
        %1092 = vmatpush1.bf16.msra.mxu0 0
        %1093 = vmatprep.subr.bf16.mxu0 0
        %1094 = vmatpush1.bf16.msra.mxu0 0
        %1095 = vmatprep.subr.bf16.mxu0 0
        %1096 = vmatpush1.bf16.msra.mxu0 0
        %1097 = vmatprep.subr.bf16.mxu0 0
        %1098 = vmatpush1.bf16.msra.mxu0 0
        %1099 = vmatprep.subr.bf16.mxu0 0
        %1100 = vmatpush1.bf16.msra.mxu0 0
        %1101 = vmatprep.subr.bf16.mxu0 0
        %1102 = vmatpush1.bf16.msra.mxu0 0
        %1103 = vmatprep.subr.bf16.mxu0 0
        %1104 = vmatpush1.bf16.msra.mxu0 0
        %1105 = vmatprep.subr.bf16.mxu0 0
        %1106 = vmatpush1.bf16.msra.mxu0 0
        %1107 = vmatprep.subr.bf16.mxu0 0
        %1108 = vmatpush1.bf16.msra.mxu0 0
        %1109 = vmatprep.subr.bf16.mxu0 0
        %1110 = vmatpush1.bf16.msra.mxu0 0
        %1111 = vmatprep.subr.bf16.mxu0 0
        %1112 = vmatpush1.bf16.msra.mxu0 0
        %1113 = vmatprep.subr.bf16.mxu0 0
        %1114 = vmatpush1.bf16.msra.mxu0 0
        %1115 = vmatprep.mubr.bf16.mxu0 0
        %1116 = vmatmul.mubr.bf16.gmra.mrb[0].mxu0 %v1018
        %v1117 = vpop.f32.mrb[0].mxu0
        %v1118 = vadd.f32 %v1069, %v1117
        %v1119 = vpop.f32.mrb[0].mxu0
        %v1120 = vpop.f32.mrb[0].mxu0
        %v1121 = vpop.f32.mrb[0].mxu0
        %1122 = vdwg.mxu0
        %1124 = vrot.lane.b32.xlu0 %v989, 120
        %v1125 = vpop.permute.xlu0 %1124
        %1127 = vrot.lane.b32.xlu0 %v989, 112
        %v1128 = vpop.permute.xlu0 %1127
        %1130 = vrot.lane.b32.xlu0 %v989, 104
        %v1131 = vpop.permute.xlu0 %1130
        %v1133 = vcombine.low %v989, %v1128
        %v1134 = vcombine.high %v989, %v1128
        %v1136 = vunpack.c.l.s4 1983009808
        %v1137 = vunpack.c.0.s8 %v1136
        %v1138 = vlaneseq
        %v1139 = vshrl.u32 %v1138, 7
        %v1140 = vsub.s32 %v1137, %v1139
        %v1141 = vrot.slane %v1133, %v1140
        %v1143 = vunpack.c.l.s4 1983009808
        %v1144 = vunpack.c.0.s8 %v1143
        %v1145 = vlaneseq
        %v1146 = vshrl.u32 %v1145, 7
        %v1147 = vsub.s32 %v1144, %v1146
        %v1148 = vrot.slane %v1134, %v1147
        %v1149 = vcombine.low %v1125, %v1131
        %v1150 = vcombine.high %v1125, %v1131
        %v1152 = vunpack.c.l.s4 1983009808
        %v1153 = vunpack.c.0.s8 %v1152
        %v1154 = vlaneseq
        %v1155 = vshrl.u32 %v1154, 7
        %v1156 = vsub.s32 %v1153, %v1155
        %v1157 = vrot.slane %v1149, %v1156
        %v1159 = vunpack.c.l.s4 1983009808
        %v1160 = vunpack.c.0.s8 %v1159
        %v1161 = vlaneseq
        %v1162 = vshrl.u32 %v1161, 7
        %v1163 = vsub.s32 %v1160, %v1162
        %v1164 = vrot.slane %v1150, %v1163
        %v1165 = vcombine.low %v1141, %v1157
        %v1166 = vcombine.high %v1141, %v1157
        %v1168 = vunpack.c.l.s4 1934713408
        %v1169 = vunpack.c.0.s8 %v1168
        %v1170 = vlaneseq
        %v1171 = vshrl.u32 %v1170, 7
        %v1172 = vsub.s32 %v1169, %v1171
        %v1173 = vrot.slane %v1165, %v1172
        %v1175 = vunpack.c.l.s4 1934713408
        %v1176 = vunpack.c.0.s8 %v1175
        %v1177 = vlaneseq
        %v1178 = vshrl.u32 %v1177, 7
        %v1179 = vsub.s32 %v1176, %v1178
        %v1180 = vrot.slane %v1166, %v1179
        %v1181 = vcombine.low %v1148, %v1164
        %v1182 = vcombine.high %v1148, %v1164
        %v1184 = vunpack.c.l.s4 1934713408
        %v1185 = vunpack.c.0.s8 %v1184
        %v1186 = vlaneseq
        %v1187 = vshrl.u32 %v1186, 7
        %v1188 = vsub.s32 %v1185, %v1187
        %v1189 = vrot.slane %v1181, %v1188
        %v1191 = vunpack.c.l.s4 1934713408
        %v1192 = vunpack.c.0.s8 %v1191
        %v1193 = vlaneseq
        %v1194 = vshrl.u32 %v1193, 7
        %v1195 = vsub.s32 %v1192, %v1194
        %v1196 = vrot.slane %v1182, %v1195
        %v1197 = vcombine.high %v1173, 0.0
        %v1198 = vcombine.high %v1180, 0.0
        %v1199 = vcombine.high %v1189, 0.0
        %v1200 = vcombine.high %v1196, 0.0
        %v1201 = vcombine.low %v1173, %v1180
        %v1203 = vunpack.c.l.s4 1983009808
        %v1204 = vunpack.c.0.s8 %v1203
        %v1205 = vlaneseq
        %v1206 = vshrl.u32 %v1205, 7
        %v1207 = vsub.s32 %v1204, %v1206
        %v1208 = vrot.slane %v1201, %v1207
        %v1209 = vcombine.low %v1197, %v1198
        %v1211 = vunpack.c.l.s4 1983009808
        %v1212 = vunpack.c.0.s8 %v1211
        %v1213 = vlaneseq
        %v1214 = vshrl.u32 %v1213, 7
        %v1215 = vsub.s32 %v1212, %v1214
        %v1216 = vrot.slane %v1209, %v1215
        %v1217 = vcombine.low %v1189, %v1196
        %v1219 = vunpack.c.l.s4 1983009808
        %v1220 = vunpack.c.0.s8 %v1219
        %v1221 = vlaneseq
        %v1222 = vshrl.u32 %v1221, 7
        %v1223 = vsub.s32 %v1220, %v1222
        %v1224 = vrot.slane %v1217, %v1223
        %v1225 = vcombine.low %v1199, %v1200
        %v1227 = vunpack.c.l.s4 1983009808
        %v1228 = vunpack.c.0.s8 %v1227
        %v1229 = vlaneseq
        %v1230 = vshrl.u32 %v1229, 7
        %v1231 = vsub.s32 %v1228, %v1230
        %v1232 = vrot.slane %v1225, %v1231
        %v1233 = vcombine.low %v1208, %v1216
        %v1234 = vcombine.high %v1208, %v1216
        %v1236 = vunpack.c.l.s4 1934713408
        %v1237 = vunpack.c.0.s8 %v1236
        %v1238 = vlaneseq
        %v1239 = vshrl.u32 %v1238, 7
        %v1240 = vsub.s32 %v1237, %v1239
        %v1241 = vrot.slane %v1233, %v1240
        %v1243 = vunpack.c.l.s4 1934713408
        %v1244 = vunpack.c.0.s8 %v1243
        %v1245 = vlaneseq
        %v1246 = vshrl.u32 %v1245, 7
        %v1247 = vsub.s32 %v1244, %v1246
        %v1248 = vrot.slane %v1234, %v1247
        %v1249 = vcombine.low %v1224, %v1232
        %v1250 = vcombine.high %v1224, %v1232
        %v1252 = vunpack.c.l.s4 1934713408
        %v1253 = vunpack.c.0.s8 %v1252
        %v1254 = vlaneseq
        %v1255 = vshrl.u32 %v1254, 7
        %v1256 = vsub.s32 %v1253, %v1255
        %v1257 = vrot.slane %v1249, %v1256
        %v1259 = vunpack.c.l.s4 1934713408
        %v1260 = vunpack.c.0.s8 %v1259
        %v1261 = vlaneseq
        %v1262 = vshrl.u32 %v1261, 7
        %v1263 = vsub.s32 %v1260, %v1262
        %v1264 = vrot.slane %v1250, %v1263
        %v1265 = vcombine.low %v1241, %v1257
        %v1266 = vcombine.high %v1241, %v1257
        %v1267 = vcombine.low %v1248, %v1264
        %v1268 = vcombine.high %v1248, %v1264
        %v1269 = vpack.c.bf16 %v1265, %v1265
        %v1270 = vpack.c.bf16 %v1266, %v1266
        %v1271 = vpack.c.bf16 %v1267, %v1267
        %v1272 = vpack.c.bf16 %v1268, %v1268
        %1274 = vrot.lane.b32.xlu0 %v1055, 120
        %v1275 = vpop.permute.xlu0 %1274
        %1277 = vrot.lane.b32.xlu0 %v1055, 112
        %v1278 = vpop.permute.xlu0 %1277
        %1280 = vrot.lane.b32.xlu0 %v1055, 104
        %v1281 = vpop.permute.xlu0 %1280
        %v1283 = vcombine.low %v1055, %v1278
        %v1284 = vcombine.high %v1055, %v1278
        %v1286 = vunpack.c.l.s4 1983009808
        %v1287 = vunpack.c.0.s8 %v1286
        %v1288 = vlaneseq
        %v1289 = vshrl.u32 %v1288, 7
        %v1290 = vsub.s32 %v1287, %v1289
        %v1291 = vrot.slane %v1283, %v1290
        %v1293 = vunpack.c.l.s4 1983009808
        %v1294 = vunpack.c.0.s8 %v1293
        %v1295 = vlaneseq
        %v1296 = vshrl.u32 %v1295, 7
        %v1297 = vsub.s32 %v1294, %v1296
        %v1298 = vrot.slane %v1284, %v1297
        %v1299 = vcombine.low %v1275, %v1281
        %v1300 = vcombine.high %v1275, %v1281
        %v1302 = vunpack.c.l.s4 1983009808
        %v1303 = vunpack.c.0.s8 %v1302
        %v1304 = vlaneseq
        %v1305 = vshrl.u32 %v1304, 7
        %v1306 = vsub.s32 %v1303, %v1305
        %v1307 = vrot.slane %v1299, %v1306
        %v1309 = vunpack.c.l.s4 1983009808
        %v1310 = vunpack.c.0.s8 %v1309
        %v1311 = vlaneseq
        %v1312 = vshrl.u32 %v1311, 7
        %v1313 = vsub.s32 %v1310, %v1312
        %v1314 = vrot.slane %v1300, %v1313
        %v1315 = vcombine.low %v1291, %v1307
        %v1316 = vcombine.high %v1291, %v1307
        %v1318 = vunpack.c.l.s4 1934713408
        %v1319 = vunpack.c.0.s8 %v1318
        %v1320 = vlaneseq
        %v1321 = vshrl.u32 %v1320, 7
        %v1322 = vsub.s32 %v1319, %v1321
        %v1323 = vrot.slane %v1315, %v1322
        %v1325 = vunpack.c.l.s4 1934713408
        %v1326 = vunpack.c.0.s8 %v1325
        %v1327 = vlaneseq
        %v1328 = vshrl.u32 %v1327, 7
        %v1329 = vsub.s32 %v1326, %v1328
        %v1330 = vrot.slane %v1316, %v1329
        %v1331 = vcombine.low %v1298, %v1314
        %v1332 = vcombine.high %v1298, %v1314
        %v1334 = vunpack.c.l.s4 1934713408
        %v1335 = vunpack.c.0.s8 %v1334
        %v1336 = vlaneseq
        %v1337 = vshrl.u32 %v1336, 7
        %v1338 = vsub.s32 %v1335, %v1337
        %v1339 = vrot.slane %v1331, %v1338
        %v1341 = vunpack.c.l.s4 1934713408
        %v1342 = vunpack.c.0.s8 %v1341
        %v1343 = vlaneseq
        %v1344 = vshrl.u32 %v1343, 7
        %v1345 = vsub.s32 %v1342, %v1344
        %v1346 = vrot.slane %v1332, %v1345
        %v1347 = vcombine.high %v1323, 0.0
        %v1348 = vcombine.high %v1330, 0.0
        %v1349 = vcombine.high %v1339, 0.0
        %v1350 = vcombine.high %v1346, 0.0
        %v1351 = vcombine.low %v1323, %v1330
        %v1353 = vunpack.c.l.s4 1983009808
        %v1354 = vunpack.c.0.s8 %v1353
        %v1355 = vlaneseq
        %v1356 = vshrl.u32 %v1355, 7
        %v1357 = vsub.s32 %v1354, %v1356
        %v1358 = vrot.slane %v1351, %v1357
        %v1359 = vcombine.low %v1347, %v1348
        %v1361 = vunpack.c.l.s4 1983009808
        %v1362 = vunpack.c.0.s8 %v1361
        %v1363 = vlaneseq
        %v1364 = vshrl.u32 %v1363, 7
        %v1365 = vsub.s32 %v1362, %v1364
        %v1366 = vrot.slane %v1359, %v1365
        %v1367 = vcombine.low %v1339, %v1346
        %v1369 = vunpack.c.l.s4 1983009808
        %v1370 = vunpack.c.0.s8 %v1369
        %v1371 = vlaneseq
        %v1372 = vshrl.u32 %v1371, 7
        %v1373 = vsub.s32 %v1370, %v1372
        %v1374 = vrot.slane %v1367, %v1373
        %v1375 = vcombine.low %v1349, %v1350
        %v1377 = vunpack.c.l.s4 1983009808
        %v1378 = vunpack.c.0.s8 %v1377
        %v1379 = vlaneseq
        %v1380 = vshrl.u32 %v1379, 7
        %v1381 = vsub.s32 %v1378, %v1380
        %v1382 = vrot.slane %v1375, %v1381
        %v1383 = vcombine.low %v1358, %v1366
        %v1384 = vcombine.high %v1358, %v1366
        %v1386 = vunpack.c.l.s4 1934713408
        %v1387 = vunpack.c.0.s8 %v1386
        %v1388 = vlaneseq
        %v1389 = vshrl.u32 %v1388, 7
        %v1390 = vsub.s32 %v1387, %v1389
        %v1391 = vrot.slane %v1383, %v1390
        %v1393 = vunpack.c.l.s4 1934713408
        %v1394 = vunpack.c.0.s8 %v1393
        %v1395 = vlaneseq
        %v1396 = vshrl.u32 %v1395, 7
        %v1397 = vsub.s32 %v1394, %v1396
        %v1398 = vrot.slane %v1384, %v1397
        %v1399 = vcombine.low %v1374, %v1382
        %v1400 = vcombine.high %v1374, %v1382
        %v1402 = vunpack.c.l.s4 1934713408
        %v1403 = vunpack.c.0.s8 %v1402
        %v1404 = vlaneseq
        %v1405 = vshrl.u32 %v1404, 7
        %v1406 = vsub.s32 %v1403, %v1405
        %v1407 = vrot.slane %v1399, %v1406
        %v1409 = vunpack.c.l.s4 1934713408
        %v1410 = vunpack.c.0.s8 %v1409
        %v1411 = vlaneseq
        %v1412 = vshrl.u32 %v1411, 7
        %v1413 = vsub.s32 %v1410, %v1412
        %v1414 = vrot.slane %v1400, %v1413
        %v1415 = vcombine.low %v1391, %v1407
        %v1416 = vcombine.high %v1391, %v1407
        %v1417 = vcombine.low %v1398, %v1414
        %v1418 = vcombine.high %v1398, %v1414
        %v1419 = vpack.c.bf16 %v1415, %v1415
        %v1420 = vpack.c.bf16 %v1416, %v1416
        %v1421 = vpack.c.bf16 %v1417, %v1417
        %v1422 = vpack.c.bf16 %v1418, %v1418
        %1424 = vrot.lane.b32.xlu0 %v1118, 120
        %v1425 = vpop.permute.xlu0 %1424
        %1427 = vrot.lane.b32.xlu0 %v1118, 112
        %v1428 = vpop.permute.xlu0 %1427
        %1430 = vrot.lane.b32.xlu0 %v1118, 104
        %v1431 = vpop.permute.xlu0 %1430
        %v1433 = vcombine.low %v1118, %v1428
        %v1434 = vcombine.high %v1118, %v1428
        %v1436 = vunpack.c.l.s4 1983009808
        %v1437 = vunpack.c.0.s8 %v1436
        %v1438 = vlaneseq
        %v1439 = vshrl.u32 %v1438, 7
        %v1440 = vsub.s32 %v1437, %v1439
        %v1441 = vrot.slane %v1433, %v1440
        %v1443 = vunpack.c.l.s4 1983009808
        %v1444 = vunpack.c.0.s8 %v1443
        %v1445 = vlaneseq
        %v1446 = vshrl.u32 %v1445, 7
        %v1447 = vsub.s32 %v1444, %v1446
        %v1448 = vrot.slane %v1434, %v1447
        %v1449 = vcombine.low %v1425, %v1431
        %v1450 = vcombine.high %v1425, %v1431
        %v1452 = vunpack.c.l.s4 1983009808
        %v1453 = vunpack.c.0.s8 %v1452
        %v1454 = vlaneseq
        %v1455 = vshrl.u32 %v1454, 7
        %v1456 = vsub.s32 %v1453, %v1455
        %v1457 = vrot.slane %v1449, %v1456
        %v1459 = vunpack.c.l.s4 1983009808
        %v1460 = vunpack.c.0.s8 %v1459
        %v1461 = vlaneseq
        %v1462 = vshrl.u32 %v1461, 7
        %v1463 = vsub.s32 %v1460, %v1462
        %v1464 = vrot.slane %v1450, %v1463
        %v1465 = vcombine.low %v1441, %v1457
        %v1466 = vcombine.high %v1441, %v1457
        %v1468 = vunpack.c.l.s4 1934713408
        %v1469 = vunpack.c.0.s8 %v1468
        %v1470 = vlaneseq
        %v1471 = vshrl.u32 %v1470, 7
        %v1472 = vsub.s32 %v1469, %v1471
        %v1473 = vrot.slane %v1465, %v1472
        %v1475 = vunpack.c.l.s4 1934713408
        %v1476 = vunpack.c.0.s8 %v1475
        %v1477 = vlaneseq
        %v1478 = vshrl.u32 %v1477, 7
        %v1479 = vsub.s32 %v1476, %v1478
        %v1480 = vrot.slane %v1466, %v1479
        %v1481 = vcombine.low %v1448, %v1464
        %v1482 = vcombine.high %v1448, %v1464
        %v1484 = vunpack.c.l.s4 1934713408
        %v1485 = vunpack.c.0.s8 %v1484
        %v1486 = vlaneseq
        %v1487 = vshrl.u32 %v1486, 7
        %v1488 = vsub.s32 %v1485, %v1487
        %v1489 = vrot.slane %v1481, %v1488
        %v1491 = vunpack.c.l.s4 1934713408
        %v1492 = vunpack.c.0.s8 %v1491
        %v1493 = vlaneseq
        %v1494 = vshrl.u32 %v1493, 7
        %v1495 = vsub.s32 %v1492, %v1494
        %v1496 = vrot.slane %v1482, %v1495
        %v1497 = vcombine.high %v1473, 0.0
        %v1498 = vcombine.high %v1480, 0.0
        %v1499 = vcombine.high %v1489, 0.0
        %v1500 = vcombine.high %v1496, 0.0
        %v1501 = vcombine.low %v1473, %v1480
        %v1503 = vunpack.c.l.s4 1983009808
        %v1504 = vunpack.c.0.s8 %v1503
        %v1505 = vlaneseq
        %v1506 = vshrl.u32 %v1505, 7
        %v1507 = vsub.s32 %v1504, %v1506
        %v1508 = vrot.slane %v1501, %v1507
        %v1509 = vcombine.low %v1497, %v1498
        %v1511 = vunpack.c.l.s4 1983009808
        %v1512 = vunpack.c.0.s8 %v1511
        %v1513 = vlaneseq
        %v1514 = vshrl.u32 %v1513, 7
        %v1515 = vsub.s32 %v1512, %v1514
        %v1516 = vrot.slane %v1509, %v1515
        %v1517 = vcombine.low %v1489, %v1496
        %v1519 = vunpack.c.l.s4 1983009808
        %v1520 = vunpack.c.0.s8 %v1519
        %v1521 = vlaneseq
        %v1522 = vshrl.u32 %v1521, 7
        %v1523 = vsub.s32 %v1520, %v1522
        %v1524 = vrot.slane %v1517, %v1523
        %v1525 = vcombine.low %v1499, %v1500
        %v1527 = vunpack.c.l.s4 1983009808
        %v1528 = vunpack.c.0.s8 %v1527
        %v1529 = vlaneseq
        %v1530 = vshrl.u32 %v1529, 7
        %v1531 = vsub.s32 %v1528, %v1530
        %v1532 = vrot.slane %v1525, %v1531
        %v1533 = vcombine.low %v1508, %v1516
        %v1534 = vcombine.high %v1508, %v1516
        %v1536 = vunpack.c.l.s4 1934713408
        %v1537 = vunpack.c.0.s8 %v1536
        %v1538 = vlaneseq
        %v1539 = vshrl.u32 %v1538, 7
        %v1540 = vsub.s32 %v1537, %v1539
        %v1541 = vrot.slane %v1533, %v1540
        %v1543 = vunpack.c.l.s4 1934713408
        %v1544 = vunpack.c.0.s8 %v1543
        %v1545 = vlaneseq
        %v1546 = vshrl.u32 %v1545, 7
        %v1547 = vsub.s32 %v1544, %v1546
        %v1548 = vrot.slane %v1534, %v1547
        %v1549 = vcombine.low %v1524, %v1532
        %v1550 = vcombine.high %v1524, %v1532
        %v1552 = vunpack.c.l.s4 1934713408
        %v1553 = vunpack.c.0.s8 %v1552
        %v1554 = vlaneseq
        %v1555 = vshrl.u32 %v1554, 7
        %v1556 = vsub.s32 %v1553, %v1555
        %v1557 = vrot.slane %v1549, %v1556
        %v1559 = vunpack.c.l.s4 1934713408
        %v1560 = vunpack.c.0.s8 %v1559
        %v1561 = vlaneseq
        %v1562 = vshrl.u32 %v1561, 7
        %v1563 = vsub.s32 %v1560, %v1562
        %v1564 = vrot.slane %v1550, %v1563
        %v1565 = vcombine.low %v1541, %v1557
        %v1566 = vcombine.high %v1541, %v1557
        %v1567 = vcombine.low %v1548, %v1564
        %v1568 = vcombine.high %v1548, %v1564
        %v1569 = vpack.c.bf16 %v1565, %v1565
        %v1570 = vpack.c.bf16 %v1566, %v1566
        %v1571 = vpack.c.bf16 %v1567, %v1567
        %v1572 = vpack.c.bf16 %v1568, %v1568
        %vm1573 = vcmask 64512
        %v1575 = vsel %vm1573, %v1269, 0
        %v1578 = vsel %vm1573, %v1419, 0
        %1580 = vmatprep.subr.bf16.mxu0 0
        %1581 = vmatpush1.bf16.xpose.msra.mxu0 %v1578
        %1582 = vmatprep.subr.bf16.mxu0 0
        %1583 = vmatpush1.bf16.xpose.msra.mxu0 0
        %1584 = vmatprep.subr.bf16.mxu0 0
        %1585 = vmatpush1.bf16.xpose.msra.mxu0 0
        %1586 = vmatprep.subr.bf16.mxu0 0
        %1587 = vmatpush1.bf16.xpose.msra.mxu0 0
        %1588 = vmatprep.subr.bf16.mxu0 0
        %1589 = vmatpush1.bf16.xpose.msra.mxu0 0
        %1590 = vmatprep.subr.bf16.mxu0 0
        %1591 = vmatpush1.bf16.xpose.msra.mxu0 0
        %1592 = vmatprep.subr.bf16.mxu0 0
        %1593 = vmatpush1.bf16.xpose.msra.mxu0 0
        %1594 = vmatprep.subr.bf16.mxu0 0
        %1595 = vmatpush1.bf16.xpose.msra.mxu0 0
        %1596 = vmatprep.subr.bf16.mxu0 0
        %1597 = vmatpush1.bf16.xpose.msra.mxu0 0
        %1598 = vmatprep.subr.bf16.mxu0 0
        %1599 = vmatpush1.bf16.xpose.msra.mxu0 0
        %1600 = vmatprep.subr.bf16.mxu0 0
        %1601 = vmatpush1.bf16.xpose.msra.mxu0 0
        %1602 = vmatprep.subr.bf16.mxu0 0
        %1603 = vmatpush1.bf16.xpose.msra.mxu0 0
        %1604 = vmatprep.subr.bf16.mxu0 0
        %1605 = vmatpush1.bf16.xpose.msra.mxu0 0
        %1606 = vmatprep.subr.bf16.mxu0 0
        %1607 = vmatpush1.bf16.xpose.msra.mxu0 0
        %1608 = vmatprep.subr.bf16.mxu0 0
        %1609 = vmatpush1.bf16.xpose.msra.mxu0 0
        %1610 = vmatprep.subr.bf16.mxu0 0
        %1611 = vmatpush1.bf16.xpose.msra.mxu0 0
        %1612 = vmatprep.mubr.bf16.mxu0 0
        %1613 = vmatmul.mubr.bf16.gmra.mrb[0].mxu0 %v1575
        %v1614 = vpop.f32.mrb[0].mxu0
        %v1615 = vadd.f32 0.0, %v1614
        %v1616 = vpop.f32.mrb[0].mxu0
        %v1617 = vpop.f32.mrb[0].mxu0
        %v1618 = vpop.f32.mrb[0].mxu0
        %1619 = vdwg.mxu0
        %v1621 = vsel %vm1573, %v1270, 0
        %v1624 = vsel %vm1573, %v1420, 0
        %1626 = vmatprep.subr.bf16.mxu0 0
        %1627 = vmatpush1.bf16.xpose.msra.mxu0 %v1624
        %1628 = vmatprep.subr.bf16.mxu0 0
        %1629 = vmatpush1.bf16.xpose.msra.mxu0 0
        %1630 = vmatprep.subr.bf16.mxu0 0
        %1631 = vmatpush1.bf16.xpose.msra.mxu0 0
        %1632 = vmatprep.subr.bf16.mxu0 0
        %1633 = vmatpush1.bf16.xpose.msra.mxu0 0
        %1634 = vmatprep.subr.bf16.mxu0 0
        %1635 = vmatpush1.bf16.xpose.msra.mxu0 0
        %1636 = vmatprep.subr.bf16.mxu0 0
        %1637 = vmatpush1.bf16.xpose.msra.mxu0 0
        %1638 = vmatprep.subr.bf16.mxu0 0
        %1639 = vmatpush1.bf16.xpose.msra.mxu0 0
        %1640 = vmatprep.subr.bf16.mxu0 0
        %1641 = vmatpush1.bf16.xpose.msra.mxu0 0
        %1642 = vmatprep.subr.bf16.mxu0 0
        %1643 = vmatpush1.bf16.xpose.msra.mxu0 0
        %1644 = vmatprep.subr.bf16.mxu0 0
        %1645 = vmatpush1.bf16.xpose.msra.mxu0 0
        %1646 = vmatprep.subr.bf16.mxu0 0
        %1647 = vmatpush1.bf16.xpose.msra.mxu0 0
        %1648 = vmatprep.subr.bf16.mxu0 0
        %1649 = vmatpush1.bf16.xpose.msra.mxu0 0
        %1650 = vmatprep.subr.bf16.mxu0 0
        %1651 = vmatpush1.bf16.xpose.msra.mxu0 0
        %1652 = vmatprep.subr.bf16.mxu0 0
        %1653 = vmatpush1.bf16.xpose.msra.mxu0 0
        %1654 = vmatprep.subr.bf16.mxu0 0
        %1655 = vmatpush1.bf16.xpose.msra.mxu0 0
        %1656 = vmatprep.subr.bf16.mxu0 0
        %1657 = vmatpush1.bf16.xpose.msra.mxu0 0
        %1658 = vmatprep.mubr.bf16.mxu0 0
        %1659 = vmatmul.mubr.bf16.gmra.mrb[0].mxu0 %v1621
        %v1660 = vpop.f32.mrb[0].mxu0
        %v1661 = vadd.f32 0.0, %v1660
        %v1662 = vpop.f32.mrb[0].mxu0
        %v1663 = vpop.f32.mrb[0].mxu0
        %v1664 = vpop.f32.mrb[0].mxu0
        %1665 = vdwg.mxu0
        %v1667 = vsel %vm1573, %v1271, 0
        %v1670 = vsel %vm1573, %v1421, 0
        %1672 = vmatprep.subr.bf16.mxu0 0
        %1673 = vmatpush1.bf16.xpose.msra.mxu0 %v1670
        %1674 = vmatprep.subr.bf16.mxu0 0
        %1675 = vmatpush1.bf16.xpose.msra.mxu0 0
        %1676 = vmatprep.subr.bf16.mxu0 0
        %1677 = vmatpush1.bf16.xpose.msra.mxu0 0
        %1678 = vmatprep.subr.bf16.mxu0 0
        %1679 = vmatpush1.bf16.xpose.msra.mxu0 0
        %1680 = vmatprep.subr.bf16.mxu0 0
        %1681 = vmatpush1.bf16.xpose.msra.mxu0 0
        %1682 = vmatprep.subr.bf16.mxu0 0
        %1683 = vmatpush1.bf16.xpose.msra.mxu0 0
        %1684 = vmatprep.subr.bf16.mxu0 0
        %1685 = vmatpush1.bf16.xpose.msra.mxu0 0
        %1686 = vmatprep.subr.bf16.mxu0 0
        %1687 = vmatpush1.bf16.xpose.msra.mxu0 0
        %1688 = vmatprep.subr.bf16.mxu0 0
        %1689 = vmatpush1.bf16.xpose.msra.mxu0 0
        %1690 = vmatprep.subr.bf16.mxu0 0
        %1691 = vmatpush1.bf16.xpose.msra.mxu0 0
        %1692 = vmatprep.subr.bf16.mxu0 0
        %1693 = vmatpush1.bf16.xpose.msra.mxu0 0
        %1694 = vmatprep.subr.bf16.mxu0 0
        %1695 = vmatpush1.bf16.xpose.msra.mxu0 0
        %1696 = vmatprep.subr.bf16.mxu0 0
        %1697 = vmatpush1.bf16.xpose.msra.mxu0 0
        %1698 = vmatprep.subr.bf16.mxu0 0
        %1699 = vmatpush1.bf16.xpose.msra.mxu0 0
        %1700 = vmatprep.subr.bf16.mxu0 0
        %1701 = vmatpush1.bf16.xpose.msra.mxu0 0
        %1702 = vmatprep.subr.bf16.mxu0 0
        %1703 = vmatpush1.bf16.xpose.msra.mxu0 0
        %1704 = vmatprep.mubr.bf16.mxu0 0
        %1705 = vmatmul.mubr.bf16.gmra.mrb[0].mxu0 %v1667
        %v1706 = vpop.f32.mrb[0].mxu0
        %v1707 = vadd.f32 0.0, %v1706
        %v1708 = vpop.f32.mrb[0].mxu0
        %v1709 = vpop.f32.mrb[0].mxu0
        %v1710 = vpop.f32.mrb[0].mxu0
        %1711 = vdwg.mxu0
        %v1713 = vsel %vm1573, %v1272, 0
        %v1716 = vsel %vm1573, %v1422, 0
        %1718 = vmatprep.subr.bf16.mxu0 0
        %1719 = vmatpush1.bf16.xpose.msra.mxu0 %v1716
        %1720 = vmatprep.subr.bf16.mxu0 0
        %1721 = vmatpush1.bf16.xpose.msra.mxu0 0
        %1722 = vmatprep.subr.bf16.mxu0 0
        %1723 = vmatpush1.bf16.xpose.msra.mxu0 0
        %1724 = vmatprep.subr.bf16.mxu0 0
        %1725 = vmatpush1.bf16.xpose.msra.mxu0 0
        %1726 = vmatprep.subr.bf16.mxu0 0
        %1727 = vmatpush1.bf16.xpose.msra.mxu0 0
        %1728 = vmatprep.subr.bf16.mxu0 0
        %1729 = vmatpush1.bf16.xpose.msra.mxu0 0
        %1730 = vmatprep.subr.bf16.mxu0 0
        %1731 = vmatpush1.bf16.xpose.msra.mxu0 0
        %1732 = vmatprep.subr.bf16.mxu0 0
        %1733 = vmatpush1.bf16.xpose.msra.mxu0 0
        %1734 = vmatprep.subr.bf16.mxu0 0
        %1735 = vmatpush1.bf16.xpose.msra.mxu0 0
        %1736 = vmatprep.subr.bf16.mxu0 0
        %1737 = vmatpush1.bf16.xpose.msra.mxu0 0
        %1738 = vmatprep.subr.bf16.mxu0 0
        %1739 = vmatpush1.bf16.xpose.msra.mxu0 0
        %1740 = vmatprep.subr.bf16.mxu0 0
        %1741 = vmatpush1.bf16.xpose.msra.mxu0 0
        %1742 = vmatprep.subr.bf16.mxu0 0
        %1743 = vmatpush1.bf16.xpose.msra.mxu0 0
        %1744 = vmatprep.subr.bf16.mxu0 0
        %1745 = vmatpush1.bf16.xpose.msra.mxu0 0
        %1746 = vmatprep.subr.bf16.mxu0 0
        %1747 = vmatpush1.bf16.xpose.msra.mxu0 0
        %1748 = vmatprep.subr.bf16.mxu0 0
        %1749 = vmatpush1.bf16.xpose.msra.mxu0 0
        %1750 = vmatprep.mubr.bf16.mxu0 0
        %1751 = vmatmul.mubr.bf16.gmra.mrb[0].mxu0 %v1713
        %v1752 = vpop.f32.mrb[0].mxu0
        %v1753 = vadd.f32 0.0, %v1752
        %v1754 = vpop.f32.mrb[0].mxu0
        %v1755 = vpop.f32.mrb[0].mxu0
        %v1756 = vpop.f32.mrb[0].mxu0
        %1757 = vdwg.mxu0
        %v1758 = vmul.f32 %v1615, 0.35355338
        %v1759 = vmul.f32 %v1661, 0.35355338
        %v1760 = vmul.f32 %v1707, 0.35355338
        %v1761 = vmul.f32 %v1753, 0.35355338
        %vm1762 = vcmp.gt.f32.partialorder %v924, 0.0
        %v1763 = vsel %vm1762, 1, 0
        %vm1764 = vcmp.eq.s32.totalorder %v1763, 1
        %v1765 = vsel %vm1764, %v1758, -1e+09
        %v1766 = vsel %vm1764, %v1759, -1e+09
        %v1767 = vsel %vm1764, %v1760, -1e+09
        %v1768 = vsel %vm1764, %v1761, -1e+09
        %v1769 = vsel %vm1573, %v1765, -inf
        %1770 = vmax.xlane.f32.xlu0 %v1769
        %v1771 = vpop.xlane.xlu0 %1770
        %v1772 = vsel %vm1573, %v1766, -inf
        %1773 = vmax.xlane.f32.xlu0 %v1772
        %v1774 = vpop.xlane.xlu0 %1773
        %v1775 = vsel %vm1573, %v1767, -inf
        %1776 = vmax.xlane.f32.xlu0 %v1775
        %v1777 = vpop.xlane.xlu0 %1776
        %v1778 = vsel %vm1573, %v1768, -inf
        %1779 = vmax.xlane.f32.xlu0 %v1778
        %v1780 = vpop.xlane.xlu0 %1779
        %v1781 = vsub.f32 %v1765, %v1771
        %v1782 = vsub.f32 %v1766, %v1774
        %v1783 = vsub.f32 %v1767, %v1777
        %v1784 = vsub.f32 %v1768, %v1780
        %v1785 = vmul.f32 %v1781, 1.442695
        %v1786 = vpow.pop %v1785
        %v1787 = vmul.f32 %v1782, 1.442695
        %v1788 = vpow.pop %v1787
        %v1789 = vmul.f32 %v1783, 1.442695
        %v1790 = vpow.pop %v1789
        %v1791 = vmul.f32 %v1784, 1.442695
        %v1792 = vpow.pop %v1791
        %v1793 = vsel %vm1573, %v1786, 0.0
        %1794 = vadd.xlane.f32.xlu0 %v1793
        %v1795 = vpop.xlane.xlu0 %1794
        %v1796 = vsel %vm1573, %v1788, 0.0
        %1797 = vadd.xlane.f32.xlu0 %v1796
        %v1798 = vpop.xlane.xlu0 %1797
        %v1799 = vsel %vm1573, %v1790, 0.0
        %1800 = vadd.xlane.f32.xlu0 %v1799
        %v1801 = vpop.xlane.xlu0 %1800
        %v1802 = vsel %vm1573, %v1792, 0.0
        %1803 = vadd.xlane.f32.xlu0 %v1802
        %v1804 = vpop.xlane.xlu0 %1803
        %v1805 = vrcp.pop %v1795
        %v1806 = vrcp.pop %v1798
        %v1807 = vrcp.pop %v1801
        %v1808 = vrcp.pop %v1804
        %v1809 = vmul.f32 %v1786, %v1805
        %v1810 = vmul.f32 %v1788, %v1806
        %v1811 = vmul.f32 %v1790, %v1807
        %v1812 = vmul.f32 %v1792, %v1808
        %v1813 = vpack.c.bf16 %v1809, %v1809
        %v1814 = vpack.c.bf16 %v1810, %v1810
        %v1815 = vpack.c.bf16 %v1811, %v1811
        %v1816 = vpack.c.bf16 %v1812, %v1812
        %v1818 = vsel %vm1573, %v1813, 0
        %vm1820 = vcmask 1043456
        %v1822 = vsel %vm1820, %v1569, 0
        %1824 = vmatprep.subr.bf16.mxu0 0
        %1825 = vmatpush1.bf16.msra.mxu0 %v1822
        %1826 = vmatprep.subr.bf16.mxu0 0
        %1827 = vmatpush1.bf16.msra.mxu0 0
        %1828 = vmatprep.subr.bf16.mxu0 0
        %1829 = vmatpush1.bf16.msra.mxu0 0
        %1830 = vmatprep.subr.bf16.mxu0 0
        %1831 = vmatpush1.bf16.msra.mxu0 0
        %1832 = vmatprep.subr.bf16.mxu0 0
        %1833 = vmatpush1.bf16.msra.mxu0 0
        %1834 = vmatprep.subr.bf16.mxu0 0
        %1835 = vmatpush1.bf16.msra.mxu0 0
        %1836 = vmatprep.subr.bf16.mxu0 0
        %1837 = vmatpush1.bf16.msra.mxu0 0
        %1838 = vmatprep.subr.bf16.mxu0 0
        %1839 = vmatpush1.bf16.msra.mxu0 0
        %1840 = vmatprep.subr.bf16.mxu0 0
        %1841 = vmatpush1.bf16.msra.mxu0 0
        %1842 = vmatprep.subr.bf16.mxu0 0
        %1843 = vmatpush1.bf16.msra.mxu0 0
        %1844 = vmatprep.subr.bf16.mxu0 0
        %1845 = vmatpush1.bf16.msra.mxu0 0
        %1846 = vmatprep.subr.bf16.mxu0 0
        %1847 = vmatpush1.bf16.msra.mxu0 0
        %1848 = vmatprep.subr.bf16.mxu0 0
        %1849 = vmatpush1.bf16.msra.mxu0 0
        %1850 = vmatprep.subr.bf16.mxu0 0
        %1851 = vmatpush1.bf16.msra.mxu0 0
        %1852 = vmatprep.subr.bf16.mxu0 0
        %1853 = vmatpush1.bf16.msra.mxu0 0
        %1854 = vmatprep.subr.bf16.mxu0 0
        %1855 = vmatpush1.bf16.msra.mxu0 0
        %1856 = vmatprep.mubr.bf16.mxu0 0
        %1857 = vmatmul.mubr.bf16.gmra.mrb[0].mxu0 %v1818
        %v1858 = vpop.f32.mrb[0].mxu0
        %v1859 = vadd.f32 0.0, %v1858
        %v1860 = vpop.f32.mrb[0].mxu0
        %v1861 = vpop.f32.mrb[0].mxu0
        %v1862 = vpop.f32.mrb[0].mxu0
        %1863 = vdwg.mxu0
        %v1865 = vsel %vm1573, %v1814, 0
        %v1868 = vsel %vm1820, %v1570, 0
        %1870 = vmatprep.subr.bf16.mxu0 0
        %1871 = vmatpush1.bf16.msra.mxu0 %v1868
        %1872 = vmatprep.subr.bf16.mxu0 0
        %1873 = vmatpush1.bf16.msra.mxu0 0
        %1874 = vmatprep.subr.bf16.mxu0 0
        %1875 = vmatpush1.bf16.msra.mxu0 0
        %1876 = vmatprep.subr.bf16.mxu0 0
        %1877 = vmatpush1.bf16.msra.mxu0 0
        %1878 = vmatprep.subr.bf16.mxu0 0
        %1879 = vmatpush1.bf16.msra.mxu0 0
        %1880 = vmatprep.subr.bf16.mxu0 0
        %1881 = vmatpush1.bf16.msra.mxu0 0
        %1882 = vmatprep.subr.bf16.mxu0 0
        %1883 = vmatpush1.bf16.msra.mxu0 0
        %1884 = vmatprep.subr.bf16.mxu0 0
        %1885 = vmatpush1.bf16.msra.mxu0 0
        %1886 = vmatprep.subr.bf16.mxu0 0
        %1887 = vmatpush1.bf16.msra.mxu0 0
        %1888 = vmatprep.subr.bf16.mxu0 0
        %1889 = vmatpush1.bf16.msra.mxu0 0
        %1890 = vmatprep.subr.bf16.mxu0 0
        %1891 = vmatpush1.bf16.msra.mxu0 0
        %1892 = vmatprep.subr.bf16.mxu0 0
        %1893 = vmatpush1.bf16.msra.mxu0 0
        %1894 = vmatprep.subr.bf16.mxu0 0
        %1895 = vmatpush1.bf16.msra.mxu0 0
        %1896 = vmatprep.subr.bf16.mxu0 0
        %1897 = vmatpush1.bf16.msra.mxu0 0
        %1898 = vmatprep.subr.bf16.mxu0 0
        %1899 = vmatpush1.bf16.msra.mxu0 0
        %1900 = vmatprep.subr.bf16.mxu0 0
        %1901 = vmatpush1.bf16.msra.mxu0 0
        %1902 = vmatprep.mubr.bf16.mxu0 0
        %1903 = vmatmul.mubr.bf16.gmra.mrb[0].mxu0 %v1865
        %v1904 = vpop.f32.mrb[0].mxu0
        %v1905 = vadd.f32 0.0, %v1904
        %v1906 = vpop.f32.mrb[0].mxu0
        %v1907 = vpop.f32.mrb[0].mxu0
        %v1908 = vpop.f32.mrb[0].mxu0
        %1909 = vdwg.mxu0
        %v1911 = vsel %vm1573, %v1815, 0
        %v1914 = vsel %vm1820, %v1571, 0
        %1916 = vmatprep.subr.bf16.mxu0 0
        %1917 = vmatpush1.bf16.msra.mxu0 %v1914
        %1918 = vmatprep.subr.bf16.mxu0 0
        %1919 = vmatpush1.bf16.msra.mxu0 0
        %1920 = vmatprep.subr.bf16.mxu0 0
        %1921 = vmatpush1.bf16.msra.mxu0 0
        %1922 = vmatprep.subr.bf16.mxu0 0
        %1923 = vmatpush1.bf16.msra.mxu0 0
        %1924 = vmatprep.subr.bf16.mxu0 0
        %1925 = vmatpush1.bf16.msra.mxu0 0
        %1926 = vmatprep.subr.bf16.mxu0 0
        %1927 = vmatpush1.bf16.msra.mxu0 0
        %1928 = vmatprep.subr.bf16.mxu0 0
        %1929 = vmatpush1.bf16.msra.mxu0 0
        %1930 = vmatprep.subr.bf16.mxu0 0
        %1931 = vmatpush1.bf16.msra.mxu0 0
        %1932 = vmatprep.subr.bf16.mxu0 0
        %1933 = vmatpush1.bf16.msra.mxu0 0
        %1934 = vmatprep.subr.bf16.mxu0 0
        %1935 = vmatpush1.bf16.msra.mxu0 0
        %1936 = vmatprep.subr.bf16.mxu0 0
        %1937 = vmatpush1.bf16.msra.mxu0 0
        %1938 = vmatprep.subr.bf16.mxu0 0
        %1939 = vmatpush1.bf16.msra.mxu0 0
        %1940 = vmatprep.subr.bf16.mxu0 0
        %1941 = vmatpush1.bf16.msra.mxu0 0
        %1942 = vmatprep.subr.bf16.mxu0 0
        %1943 = vmatpush1.bf16.msra.mxu0 0
        %1944 = vmatprep.subr.bf16.mxu0 0
        %1945 = vmatpush1.bf16.msra.mxu0 0
        %1946 = vmatprep.subr.bf16.mxu0 0
        %1947 = vmatpush1.bf16.msra.mxu0 0
        %1948 = vmatprep.mubr.bf16.mxu0 0
        %1949 = vmatmul.mubr.bf16.gmra.mrb[0].mxu0 %v1911
        %v1950 = vpop.f32.mrb[0].mxu0
        %v1951 = vadd.f32 0.0, %v1950
        %v1952 = vpop.f32.mrb[0].mxu0
        %v1953 = vpop.f32.mrb[0].mxu0
        %v1954 = vpop.f32.mrb[0].mxu0
        %1955 = vdwg.mxu0
        %v1957 = vsel %vm1573, %v1816, 0
        %v1960 = vsel %vm1820, %v1572, 0
        %1962 = vmatprep.subr.bf16.mxu0 0
        %1963 = vmatpush1.bf16.msra.mxu0 %v1960
        %1964 = vmatprep.subr.bf16.mxu0 0
        %1965 = vmatpush1.bf16.msra.mxu0 0
        %1966 = vmatprep.subr.bf16.mxu0 0
        %1967 = vmatpush1.bf16.msra.mxu0 0
        %1968 = vmatprep.subr.bf16.mxu0 0
        %1969 = vmatpush1.bf16.msra.mxu0 0
        %1970 = vmatprep.subr.bf16.mxu0 0
        %1971 = vmatpush1.bf16.msra.mxu0 0
        %1972 = vmatprep.subr.bf16.mxu0 0
        %1973 = vmatpush1.bf16.msra.mxu0 0
        %1974 = vmatprep.subr.bf16.mxu0 0
        %1975 = vmatpush1.bf16.msra.mxu0 0
        %1976 = vmatprep.subr.bf16.mxu0 0
        %1977 = vmatpush1.bf16.msra.mxu0 0
        %1978 = vmatprep.subr.bf16.mxu0 0
        %1979 = vmatpush1.bf16.msra.mxu0 0
        %1980 = vmatprep.subr.bf16.mxu0 0
        %1981 = vmatpush1.bf16.msra.mxu0 0
        %1982 = vmatprep.subr.bf16.mxu0 0
        %1983 = vmatpush1.bf16.msra.mxu0 0
        %1984 = vmatprep.subr.bf16.mxu0 0
        %1985 = vmatpush1.bf16.msra.mxu0 0
        %1986 = vmatprep.subr.bf16.mxu0 0
        %1987 = vmatpush1.bf16.msra.mxu0 0
        %1988 = vmatprep.subr.bf16.mxu0 0
        %1989 = vmatpush1.bf16.msra.mxu0 0
        %1990 = vmatprep.subr.bf16.mxu0 0
        %1991 = vmatpush1.bf16.msra.mxu0 0
        %1992 = vmatprep.subr.bf16.mxu0 0
        %1993 = vmatpush1.bf16.msra.mxu0 0
        %1994 = vmatprep.mubr.bf16.mxu0 0
        %1995 = vmatmul.mubr.bf16.gmra.mrb[0].mxu0 %v1957
        %v1996 = vpop.f32.mrb[0].mxu0
        %v1997 = vadd.f32 0.0, %v1996
        %v1998 = vpop.f32.mrb[0].mxu0
        %v1999 = vpop.f32.mrb[0].mxu0
        %v2000 = vpop.f32.mrb[0].mxu0
        %2001 = vdwg.mxu0
        %v2002 = vcombine.low %v1859, %v1951
        %v2003 = vcombine.high %v1859, %v1951
        %v2005 = vunpack.c.l.s4 1983009808
        %v2006 = vunpack.c.0.s8 %v2005
        %v2007 = vlaneseq
        %v2008 = vshrl.u32 %v2007, 7
        %v2009 = vsub.s32 %v2006, %v2008
        %v2010 = vrot.slane %v2002, %v2009
        %v2012 = vunpack.c.l.s4 1983009808
        %v2013 = vunpack.c.0.s8 %v2012
        %v2014 = vlaneseq
        %v2015 = vshrl.u32 %v2014, 7
        %v2016 = vsub.s32 %v2013, %v2015
        %v2017 = vrot.slane %v2003, %v2016
        %v2018 = vcombine.low %v1905, %v1997
        %v2019 = vcombine.high %v1905, %v1997
        %v2021 = vunpack.c.l.s4 1983009808
        %v2022 = vunpack.c.0.s8 %v2021
        %v2023 = vlaneseq
        %v2024 = vshrl.u32 %v2023, 7
        %v2025 = vsub.s32 %v2022, %v2024
        %v2026 = vrot.slane %v2018, %v2025
        %v2028 = vunpack.c.l.s4 1983009808
        %v2029 = vunpack.c.0.s8 %v2028
        %v2030 = vlaneseq
        %v2031 = vshrl.u32 %v2030, 7
        %v2032 = vsub.s32 %v2029, %v2031
        %v2033 = vrot.slane %v2019, %v2032
        %v2034 = vcombine.low %v2010, %v2026
        %v2035 = vcombine.high %v2010, %v2026
        %v2037 = vunpack.c.l.s4 1934713408
        %v2038 = vunpack.c.0.s8 %v2037
        %v2039 = vlaneseq
        %v2040 = vshrl.u32 %v2039, 7
        %v2041 = vsub.s32 %v2038, %v2040
        %v2042 = vrot.slane %v2034, %v2041
        %v2044 = vunpack.c.l.s4 1934713408
        %v2045 = vunpack.c.0.s8 %v2044
        %v2046 = vlaneseq
        %v2047 = vshrl.u32 %v2046, 7
        %v2048 = vsub.s32 %v2045, %v2047
        %v2049 = vrot.slane %v2035, %v2048
        %v2050 = vcombine.low %v2017, %v2033
        %v2051 = vcombine.high %v2017, %v2033
        %v2053 = vunpack.c.l.s4 1934713408
        %v2054 = vunpack.c.0.s8 %v2053
        %v2055 = vlaneseq
        %v2056 = vshrl.u32 %v2055, 7
        %v2057 = vsub.s32 %v2054, %v2056
        %v2058 = vrot.slane %v2050, %v2057
        %v2060 = vunpack.c.l.s4 1934713408
        %v2061 = vunpack.c.0.s8 %v2060
        %v2062 = vlaneseq
        %v2063 = vshrl.u32 %v2062, 7
        %v2064 = vsub.s32 %v2061, %v2063
        %v2065 = vrot.slane %v2051, %v2064
        %v2066 = vcombine.high %v2042, 0.0
        %v2067 = vcombine.high %v2049, 0.0
        %v2068 = vcombine.high %v2058, 0.0
        %v2069 = vcombine.high %v2065, 0.0
        %v2070 = vcombine.low %v2042, %v2049
        %v2072 = vunpack.c.l.s4 1983009808
        %v2073 = vunpack.c.0.s8 %v2072
        %v2074 = vlaneseq
        %v2075 = vshrl.u32 %v2074, 7
        %v2076 = vsub.s32 %v2073, %v2075
        %v2077 = vrot.slane %v2070, %v2076
        %v2078 = vcombine.low %v2066, %v2067
        %v2080 = vunpack.c.l.s4 1983009808
        %v2081 = vunpack.c.0.s8 %v2080
        %v2082 = vlaneseq
        %v2083 = vshrl.u32 %v2082, 7
        %v2084 = vsub.s32 %v2081, %v2083
        %v2085 = vrot.slane %v2078, %v2084
        %v2086 = vcombine.low %v2058, %v2065
        %v2088 = vunpack.c.l.s4 1983009808
        %v2089 = vunpack.c.0.s8 %v2088
        %v2090 = vlaneseq
        %v2091 = vshrl.u32 %v2090, 7
        %v2092 = vsub.s32 %v2089, %v2091
        %v2093 = vrot.slane %v2086, %v2092
        %v2094 = vcombine.low %v2068, %v2069
        %v2096 = vunpack.c.l.s4 1983009808
        %v2097 = vunpack.c.0.s8 %v2096
        %v2098 = vlaneseq
        %v2099 = vshrl.u32 %v2098, 7
        %v2100 = vsub.s32 %v2097, %v2099
        %v2101 = vrot.slane %v2094, %v2100
        %v2102 = vcombine.low %v2077, %v2085
        %v2103 = vcombine.high %v2077, %v2085
        %v2105 = vunpack.c.l.s4 1934713408
        %v2106 = vunpack.c.0.s8 %v2105
        %v2107 = vlaneseq
        %v2108 = vshrl.u32 %v2107, 7
        %v2109 = vsub.s32 %v2106, %v2108
        %v2110 = vrot.slane %v2102, %v2109
        %v2112 = vunpack.c.l.s4 1934713408
        %v2113 = vunpack.c.0.s8 %v2112
        %v2114 = vlaneseq
        %v2115 = vshrl.u32 %v2114, 7
        %v2116 = vsub.s32 %v2113, %v2115
        %v2117 = vrot.slane %v2103, %v2116
        %v2118 = vcombine.low %v2093, %v2101
        %v2119 = vcombine.high %v2093, %v2101
        %v2121 = vunpack.c.l.s4 1934713408
        %v2122 = vunpack.c.0.s8 %v2121
        %v2123 = vlaneseq
        %v2124 = vshrl.u32 %v2123, 7
        %v2125 = vsub.s32 %v2122, %v2124
        %v2126 = vrot.slane %v2118, %v2125
        %v2128 = vunpack.c.l.s4 1934713408
        %v2129 = vunpack.c.0.s8 %v2128
        %v2130 = vlaneseq
        %v2131 = vshrl.u32 %v2130, 7
        %v2132 = vsub.s32 %v2129, %v2131
        %v2133 = vrot.slane %v2119, %v2132
        %v2134 = vcombine.low %v2110, %v2126
        %v2135 = vcombine.high %v2110, %v2126
        %v2136 = vcombine.low %v2117, %v2133
        %v2137 = vcombine.high %v2117, %v2133
        %2139 = vrot.lane.b32.xlu0 %v2135, 8
        %v2140 = vpop.permute.xlu0 %2139
        %2143 = vrot.lane.b32.xlu0 %v2136, 16
        %v2144 = vpop.permute.xlu0 %2143
        %2147 = vrot.lane.b32.xlu0 %v2137, 24
        %v2148 = vpop.permute.xlu0 %2147
        %v2150 = vsel %vm1573, %v2134, %v2140
        %vm2151 = vcmask 130048
        %v2152 = vsel %vm2151, %v2150, %v2144
        %vm2153 = vcmask 195584
        %v2154 = vsel %vm2153, %v2152, %v2148
        %v2155 = vpack.c.bf16 %v2154, %v2154
        %v2156 = vld [vmem:[#allocation17] sm:$0xf]
        %v2157 = vld [vmem:[#allocation17 + $0x4] sm:$0xf]
        %v2158 = vld [vmem:[#allocation17 + $0x8] sm:$0xf]
        %v2159 = vld [vmem:[#allocation17 + $0xc] sm:$0xf]
        %v2160 = vld [vmem:[#allocation19] sm:$0x1]
        %v2162 = vlaneseq
        %v2163 = vshrl.u32 %v2162, 7
        %v2164 = vsub.s32 0, %v2163
        %v2165 = vrot.slane %v2160, %v2164
        %v2171 = vunpack.c.l.b16 %v2156
        %v2172 = vunpack.c.l.b16 %v2157
        %v2173 = vunpack.c.l.b16 %v2158
        %v2174 = vunpack.c.l.b16 %v2159
        %v2175 = vpack.c.b16 %v2172, %v2171
        %v2176 = vpack.c.b16 %v2174, %v2173
        %v2180 = vsel %vm950, %v2155, 0
        %2182 = vmatprep.subr.bf16.mxu0 0
        %2183 = vmatpush1.bf16.msra.mxu0 %v2175
        %2184 = vmatprep.subr.bf16.mxu0 0
        %2185 = vmatpush1.bf16.msra.mxu0 %v2176
        %2186 = vmatprep.subr.bf16.mxu0 0
        %2187 = vmatpush1.bf16.msra.mxu0 0
        %2188 = vmatprep.subr.bf16.mxu0 0
        %2189 = vmatpush1.bf16.msra.mxu0 0
        %2190 = vmatprep.subr.bf16.mxu0 0
        %2191 = vmatpush1.bf16.msra.mxu0 0
        %2192 = vmatprep.subr.bf16.mxu0 0
        %2193 = vmatpush1.bf16.msra.mxu0 0
        %2194 = vmatprep.subr.bf16.mxu0 0
        %2195 = vmatpush1.bf16.msra.mxu0 0
        %2196 = vmatprep.subr.bf16.mxu0 0
        %2197 = vmatpush1.bf16.msra.mxu0 0
        %2198 = vmatprep.subr.bf16.mxu0 0
        %2199 = vmatpush1.bf16.msra.mxu0 0
        %2200 = vmatprep.subr.bf16.mxu0 0
        %2201 = vmatpush1.bf16.msra.mxu0 0
        %2202 = vmatprep.subr.bf16.mxu0 0
        %2203 = vmatpush1.bf16.msra.mxu0 0
        %2204 = vmatprep.subr.bf16.mxu0 0
        %2205 = vmatpush1.bf16.msra.mxu0 0
        %2206 = vmatprep.subr.bf16.mxu0 0
        %2207 = vmatpush1.bf16.msra.mxu0 0
        %2208 = vmatprep.subr.bf16.mxu0 0
        %2209 = vmatpush1.bf16.msra.mxu0 0
        %2210 = vmatprep.subr.bf16.mxu0 0
        %2211 = vmatpush1.bf16.msra.mxu0 0
        %2212 = vmatprep.subr.bf16.mxu0 0
        %2213 = vmatpush1.bf16.msra.mxu0 0
        %2214 = vmatprep.mubr.bf16.mxu0 0
        %2215 = vmatmul.mubr.bf16.gmra.mrb[0].mxu0 %v2180
        %v2216 = vpop.f32.mrb[0].mxu0
        %v2217 = vadd.f32 %v2165, %v2216
        %v2218 = vpop.f32.mrb[0].mxu0
        %v2219 = vpop.f32.mrb[0].mxu0
        %v2220 = vpop.f32.mrb[0].mxu0
        %2221 = vdwg.mxu0
        %v2222 = vadd.f32 %v922, %v2217
        %v2223 = vld [vmem:[#allocation20] sm:$0x1]
        %v2224 = vld [vmem:[#allocation22] sm:$0x1]
        %v2225 = vsel %vm950, %v2222, 0.0
        %2226 = vadd.xlane.f32.xlu0 %v2225
        %v2227 = vpop.xlane.xlu0 %2226
        %v2228 = vrcp.pop 32.0
        %v2229 = vmul.f32 %v2227, %v2228
        %v2230 = vsub.f32 %v2222, %v2229
        %v2231 = vmul.f32 %v2230, %v2230
        %v2232 = vsel %vm950, %v2231, 0.0
        %2233 = vadd.xlane.f32.xlu0 %v2232
        %v2234 = vpop.xlane.xlu0 %2233
        %v2235 = vmul.f32 %v2234, %v2228
        %v2236 = vadd.f32 %v2235, 1e-05
        %v2237 = vrsqrt.pop %v2236
        %v2238 = vmul.f32 %v2230, %v2237
        %v2240 = vlaneseq
        %v2241 = vshrl.u32 %v2240, 7
        %v2242 = vsub.s32 0, %v2241
        %v2243 = vrot.slane %v2223, %v2242
        %v2245 = vmul.f32 %v2238, %v2243
        %v2247 = vlaneseq
        %v2248 = vshrl.u32 %v2247, 7
        %v2249 = vsub.s32 0, %v2248
        %v2250 = vrot.slane %v2224, %v2249
        %v2252 = vadd.f32 %v2245, %v2250
        %v2253 = vpack.c.bf16 %v2252, %v2252
        %v2254 = vld [vmem:[#allocation23] sm:$0xf]
        %v2255 = vld [vmem:[#allocation23 + $0x4] sm:$0xf]
        %v2256 = vld [vmem:[#allocation23 + $0x8] sm:$0xf]
        %v2257 = vld [vmem:[#allocation23 + $0xc] sm:$0xf]
        %v2258 = vld [vmem:[#allocation25] sm:$0x1]
        %v2260 = vlaneseq
        %v2261 = vshrl.u32 %v2260, 7
        %v2262 = vsub.s32 0, %v2261
        %v2263 = vrot.slane %v2258, %v2262
        %v2269 = vunpack.c.l.b16 %v2254
        %v2270 = vunpack.c.l.b16 %v2255
        %v2271 = vunpack.c.l.b16 %v2256
        %v2272 = vunpack.c.l.b16 %v2257
        %v2273 = vpack.c.b16 %v2270, %v2269
        %v2274 = vpack.c.b16 %v2272, %v2271
        %v2278 = vsel %vm950, %v2253, 0
        %2280 = vmatprep.subr.bf16.mxu0 0
        %2281 = vmatpush1.bf16.msra.mxu0 %v2273
        %2282 = vmatprep.subr.bf16.mxu0 0
        %2283 = vmatpush1.bf16.msra.mxu0 %v2274
        %2284 = vmatprep.subr.bf16.mxu0 0
        %2285 = vmatpush1.bf16.msra.mxu0 0
        %2286 = vmatprep.subr.bf16.mxu0 0
        %2287 = vmatpush1.bf16.msra.mxu0 0
        %2288 = vmatprep.subr.bf16.mxu0 0
        %2289 = vmatpush1.bf16.msra.mxu0 0
        %2290 = vmatprep.subr.bf16.mxu0 0
        %2291 = vmatpush1.bf16.msra.mxu0 0
        %2292 = vmatprep.subr.bf16.mxu0 0
        %2293 = vmatpush1.bf16.msra.mxu0 0
        %2294 = vmatprep.subr.bf16.mxu0 0
        %2295 = vmatpush1.bf16.msra.mxu0 0
        %2296 = vmatprep.subr.bf16.mxu0 0
        %2297 = vmatpush1.bf16.msra.mxu0 0
        %2298 = vmatprep.subr.bf16.mxu0 0
        %2299 = vmatpush1.bf16.msra.mxu0 0
        %2300 = vmatprep.subr.bf16.mxu0 0
        %2301 = vmatpush1.bf16.msra.mxu0 0
        %2302 = vmatprep.subr.bf16.mxu0 0
        %2303 = vmatpush1.bf16.msra.mxu0 0
        %2304 = vmatprep.subr.bf16.mxu0 0
        %2305 = vmatpush1.bf16.msra.mxu0 0
        %2306 = vmatprep.subr.bf16.mxu0 0
        %2307 = vmatpush1.bf16.msra.mxu0 0
        %2308 = vmatprep.subr.bf16.mxu0 0
        %2309 = vmatpush1.bf16.msra.mxu0 0
        %2310 = vmatprep.subr.bf16.mxu0 0
        %2311 = vmatpush1.bf16.msra.mxu0 0
        %2312 = vmatprep.mubr.bf16.mxu0 0
        %2313 = vmatmul.mubr.bf16.gmra.mrb[0].mxu0 %v2278
        %v2314 = vpop.f32.mrb[0].mxu0
        %v2315 = vadd.f32 %v2263, %v2314
        %v2316 = vpop.f32.mrb[0].mxu0
        %v2317 = vpop.f32.mrb[0].mxu0
        %v2318 = vpop.f32.mrb[0].mxu0
        %2319 = vdwg.mxu0
        %v2320 = vmax.f32 %v2315, 0.0
        %v2321 = vpack.c.bf16 %v2320, %v2320
        %v2322 = vld [vmem:[#allocation26] sm:$0xf]
        %v2323 = vld [vmem:[#allocation26 + $0x4] sm:$0xf]
        %v2324 = vld [vmem:[#allocation26 + $0x8] sm:$0xf]
        %v2325 = vld [vmem:[#allocation26 + $0xc] sm:$0xf]
        %v2326 = vld [vmem:[#allocation26 + $0x10] sm:$0xf]
        %v2327 = vld [vmem:[#allocation26 + $0x14] sm:$0xf]
        %v2328 = vld [vmem:[#allocation26 + $0x18] sm:$0xf]
        %v2329 = vld [vmem:[#allocation26 + $0x1c] sm:$0xf]
        %v2330 = vld [vmem:[#allocation28] sm:$0x1]
        %v2332 = vlaneseq
        %v2333 = vshrl.u32 %v2332, 7
        %v2334 = vsub.s32 0, %v2333
        %v2335 = vrot.slane %v2330, %v2334
        %v2345 = vunpack.c.l.b16 %v2322
        %v2346 = vunpack.c.l.b16 %v2323
        %v2347 = vunpack.c.l.b16 %v2324
        %v2348 = vunpack.c.l.b16 %v2325
        %v2349 = vunpack.c.l.b16 %v2326
        %v2350 = vunpack.c.l.b16 %v2327
        %v2351 = vunpack.c.l.b16 %v2328
        %v2352 = vunpack.c.l.b16 %v2329
        %v2353 = vpack.c.b16 %v2346, %v2345
        %v2354 = vpack.c.b16 %v2348, %v2347
        %v2355 = vpack.c.b16 %v2350, %v2349
        %v2356 = vpack.c.b16 %v2352, %v2351
        %vm2361 = vcmask 523264
        %v2363 = vsel %vm2361, %v2321, 0
        %2365 = vmatprep.subr.bf16.mxu0 0
        %2366 = vmatpush1.bf16.msra.mxu0 %v2353
        %2367 = vmatprep.subr.bf16.mxu0 0
        %2368 = vmatpush1.bf16.msra.mxu0 %v2354
        %2369 = vmatprep.subr.bf16.mxu0 0
        %2370 = vmatpush1.bf16.msra.mxu0 %v2355
        %2371 = vmatprep.subr.bf16.mxu0 0
        %2372 = vmatpush1.bf16.msra.mxu0 %v2356
        %2373 = vmatprep.subr.bf16.mxu0 0
        %2374 = vmatpush1.bf16.msra.mxu0 0
        %2375 = vmatprep.subr.bf16.mxu0 0
        %2376 = vmatpush1.bf16.msra.mxu0 0
        %2377 = vmatprep.subr.bf16.mxu0 0
        %2378 = vmatpush1.bf16.msra.mxu0 0
        %2379 = vmatprep.subr.bf16.mxu0 0
        %2380 = vmatpush1.bf16.msra.mxu0 0
        %2381 = vmatprep.subr.bf16.mxu0 0
        %2382 = vmatpush1.bf16.msra.mxu0 0
        %2383 = vmatprep.subr.bf16.mxu0 0
        %2384 = vmatpush1.bf16.msra.mxu0 0
        %2385 = vmatprep.subr.bf16.mxu0 0
        %2386 = vmatpush1.bf16.msra.mxu0 0
        %2387 = vmatprep.subr.bf16.mxu0 0
        %2388 = vmatpush1.bf16.msra.mxu0 0
        %2389 = vmatprep.subr.bf16.mxu0 0
        %2390 = vmatpush1.bf16.msra.mxu0 0
        %2391 = vmatprep.subr.bf16.mxu0 0
        %2392 = vmatpush1.bf16.msra.mxu0 0
        %2393 = vmatprep.subr.bf16.mxu0 0
        %2394 = vmatpush1.bf16.msra.mxu0 0
        %2395 = vmatprep.subr.bf16.mxu0 0
        %2396 = vmatpush1.bf16.msra.mxu0 0
        %2397 = vmatprep.mubr.bf16.mxu0 0
        %2398 = vmatmul.mubr.bf16.gmra.mrb[0].mxu0 %v2363
        %v2399 = vpop.f32.mrb[0].mxu0
        %v2400 = vadd.f32 %v2335, %v2399
        %v2401 = vpop.f32.mrb[0].mxu0
        %v2402 = vpop.f32.mrb[0].mxu0
        %v2403 = vpop.f32.mrb[0].mxu0
        %2404 = vdwg.mxu0
        %v2405 = vadd.f32 %v2252, %v2400
        %v2406 = vld [vmem:[#allocation29] sm:$0x1]
        %v2407 = vld [vmem:[#allocation31] sm:$0x1]
        %v2408 = vsel %vm950, %v2405, 0.0
        %2409 = vadd.xlane.f32.xlu0 %v2408
        %v2410 = vpop.xlane.xlu0 %2409
        %v2411 = vmul.f32 %v2410, %v2228
        %v2412 = vsub.f32 %v2405, %v2411
        %v2413 = vmul.f32 %v2412, %v2412
        %v2414 = vsel %vm950, %v2413, 0.0
        %2415 = vadd.xlane.f32.xlu0 %v2414
        %v2416 = vpop.xlane.xlu0 %2415
        %v2417 = vmul.f32 %v2416, %v2228
        %v2418 = vadd.f32 %v2417, 1e-05
        %v2419 = vrsqrt.pop %v2418
        %v2420 = vmul.f32 %v2412, %v2419
        %v2422 = vlaneseq
        %v2423 = vshrl.u32 %v2422, 7
        %v2424 = vsub.s32 0, %v2423
        %v2425 = vrot.slane %v2406, %v2424
        %v2427 = vmul.f32 %v2420, %v2425
        %v2429 = vlaneseq
        %v2430 = vshrl.u32 %v2429, 7
        %v2431 = vsub.s32 0, %v2430
        %v2432 = vrot.slane %v2407, %v2431
        %v2434 = vadd.f32 %v2427, %v2432
        %2435 = vst.msk [vmem:[%s920] sm:$0xff] %vm950, %v2434
        %s2436 = sand.u32 %s487, 1
        %s2437 = scalar_lea.sflag [#allocation4], %s2436
        %s2438 = sand.u32 %s487, 1
        %s2439 = smul.addr %s2438, 8
        %s2440 = scalar_lea.vmem [#allocation32], %s2439
        // Predicated region
        $region173: #{tpu_custom_call.1} parent=95 // pred_check
          %p2441 = pneg %p497
        $region174: #{tpu_custom_call.1} parent=95 // pred_check_branch
          %2443 = sbr.rel (%p2441) target = $region176
        $region175: #{tpu_custom_call.1} parent=95 // pred_region
          %s2445 = ssub.s32 128, 128
          %2446 = vsyncadd %s2437, %s2445
          %s2447 = sadd.s32 %s52, %s51
          %s2448 = smul.addr %s2447, 128
          %s2449 = scalar_lea.hbm %s19, %s2448
          %s2451 = sshll.u32 %s2440, 4
          %s2452 = int_to_ptr.vmem [resolvable:$true] %s2451
          %2454 = dma.vmem_to_hbm [thread:$0]  %s2452, 128, %s2449, %s2437
        $region176: #{tpu_custom_call.1} parent=95 // pred_fallthru
          _
      $region96: #{tpu_custom_call.1} parent=5 // pred_fallthru
        _
      %p2455 = scmp.le.s32.totalorder 2, %s42
      // Predicated region
      $region177: #{tpu_custom_call.1} parent=5 // pred_check
        %p2456 = pneg %p2455
      $region178: #{tpu_custom_call.1} parent=5 // pred_check_branch
        %2458 = sbr.rel (%p2456) target = $region180
      $region179: #{tpu_custom_call.1} parent=5 // pred_region
        %s2459 = ssub.s32 %s42, 2
        // Predicated region
        $region181: #{tpu_custom_call.1} parent=179 // pred_check
          %p2460 = pneg %p503
        $region182: #{tpu_custom_call.1} parent=179 // pred_check_branch
          %2462 = sbr.rel (%p2460) target = $region184
        $region183: #{tpu_custom_call.1} parent=179 // pred_region
          %s2463 = sand.u32 %s488, 1
          %s2464 = scalar_lea.sflag [#allocation4], %s2463
          %s2465 = sand.u32 %s488, 1
          %s2466 = smul.addr %s2465, 8
          %s2467 = scalar_lea.vmem [#allocation32], %s2466
          %2468 = dma.done %s2464, 128
        $region184: #{tpu_custom_call.1} parent=179 // pred_fallthru
          _
      $region180: #{tpu_custom_call.1} parent=5 // pred_fallthru
        _
    $region6: #{tpu_custom_call.1} parent=1 // loop_footer
      %s46 = sadd.s32 1, %s42
    $region7: #{tpu_custom_call.1} parent=1 // loop_footer_branch
      %41 = sbr.rel target = $region3
    $region8: #{tpu_custom_call.1} parent=1 // loop_exit
      _
    %2469 = vsyncpa [#allocation3], 1
    %s2470 = scalar_lea.sflag [#allocation3], 1
    %2471 = vsyncpa %s2470, 1
    %2472 = vsyncpa [#allocation6], 1
    %s2473 = scalar_lea.sflag [#allocation6], 1
    %2474 = vsyncpa %s2473, 1
    %2475 = vsyncpa [#allocation9], 1
    %2476 = vsyncpa [#allocation12], 1
    %2477 = vsyncpa [#allocation15], 1
    %2478 = vsyncpa [#allocation18], 1
    %2479 = vsyncpa [#allocation21], 1
    %2480 = vsyncpa [#allocation24], 1
    %2481 = vsyncpa [#allocation27], 1
    %2482 = vsyncpa [#allocation30], 1
    %2483 = vsyncpa [#allocation4], 1
    %s2484 = scalar_lea.sflag [#allocation4], 1
    %2485 = vsyncpa %s2484, 1

</llo_original>
